<compile_context>
chip_gen: v7x
topology: tpu7x:2x2x1
jax: 0.10.0
libtpu: 0.0.40
codegen_flags: <defaults>
</compile_context>

<pallas_src>
import jax
import jax.numpy as jnp
from jax.experimental import pallas as pl
from jax.experimental.pallas import tpu as pltpu


def _round_up(x, m):
    return ((x + m - 1) // m) * m


def _round_down(x, m):
    return (x // m) * m


def _xl_pos_emb_kernel(pos_ref, inv_freq_ref, out_ref):
    # pos_ref:      (TL, 1)        f32
    # inv_freq_ref: (1, d_half)    f32
    # out_ref:      (TL, 2*d_half) out_dtype
    x = pos_ref[...] * inv_freq_ref[...]                      # (TL, d_half), f32
    # In-register concat + single full-block store (unmasked / lane-dense when
    # d_half % 128 == 0); cast to the output dtype only at the store.
    out_ref[...] = jnp.concatenate([jnp.sin(x), jnp.cos(x)], axis=-1).astype(out_ref.dtype)


def xl_positional_embedding(positions, inv_freq, *, out_dtype=jnp.float32,
                            tile_rows_max=1024, vmem_block_budget_bytes=4 * 1024 * 1024,
                            use_pallas=None):
    """positions: int/float array [L]; inv_freq: f32 array [d_model//2].

    Returns pos_emb: array [L, 1, d_model] in `out_dtype` (default f32, matching PyTorch).
    Dropout is treated as identity (eval mode).
    """
    L = positions.shape[0]
    d_half = inv_freq.shape[0]
    d_model = 2 * d_half

    pos_f = positions.astype(jnp.float32)
    inv_f = inv_freq.astype(jnp.float32)

    # Small-shape fallback: narrow (<128-lane) halves force masked stores and the
    # fixed per-step / launch cost dominates tiny problems; let XLA fuse it.
    if use_pallas is None:
        use_pallas = (d_half >= 128) and (L * d_model >= (1 << 20))
    if not use_pallas:
        sinusoid_inp = pos_f[:, None] * inv_f[None, :]
        out = jnp.concatenate([jnp.sin(sinusoid_inp), jnp.cos(sinusoid_inp)],
                              axis=-1).astype(out_dtype)
        return out.reshape(L, 1, d_model)

    itemsize = jnp.dtype(out_dtype).itemsize

    # Row tile from a VMEM budget: double-buffered output block = 2*TL*d_model*itemsize.
    # Conservative default leaves headroom (inputs + f32 sin/cos temporaries) under
    # v5e's 16 MiB default scoped VMEM; raise `vmem_block_budget_bytes` on v6e/v7x.
    tl_budget = max(8, _round_down(vmem_block_budget_bytes // (2 * d_model * itemsize), 8))
    # Guarantee >= 2 grid tiles when L allows it, so v7x's two TCs both get work.
    tl_split = _round_up(pl.cdiv(L, 2), 8)
    TL = max(8, min(tl_budget, tile_rows_max, tl_split))
    num_tiles = pl.cdiv(L, TL)   # ragged last block: Pallas masks its writes.

    pos2d = pos_f.reshape(L, 1)
    inv2d = inv_f.reshape(1, d_half)

    cost = pl.CostEstimate(
        flops=L * d_half,                    # the outer-product multiply
        transcendentals=2 * L * d_half,      # sin + cos (advisory; VPU polynomials in reality)
        bytes_accessed=L * d_model * itemsize + 4 * (L + d_half),
    )

    out = pl.pallas_call(
        _xl_pos_emb_kernel,
        out_shape=jax.ShapeDtypeStruct((L, d_model), out_dtype),
        grid=(num_tiles,),
        in_specs=[
            pl.BlockSpec((TL, 1), lambda i: (i, 0)),
            pl.BlockSpec((1, d_half), lambda i: (0, 0)),   # constant block, not re-DMA'd per step
        ],
        out_specs=pl.BlockSpec((TL, d_model), lambda i: (i, 0)),
        compiler_params=pltpu.CompilerParams(dimension_semantics=("parallel",)),
        cost_estimate=cost,
    )(pos2d, inv2d)

    # [L, d_model] -> [L, 1, d_model]  (the .unsqueeze(1) in the PyTorch forward); free reshape.
    return out.reshape(L, 1, d_model)


def make_inv_freq(d_model):
    # Matches: inv_freq = 1 / 10000 ** (torch.arange(0.0, d_model, 2.0) / d_model)
    return 1.0 / (10000.0 ** (jnp.arange(0.0, d_model, 2.0, dtype=jnp.float32) / d_model))


def _reference(positions, inv_freq):
    sinusoid_inp = jnp.einsum("i,j->ij", positions.astype(jnp.float32), inv_freq)
    return jnp.concatenate([jnp.sin(sinusoid_inp), jnp.cos(sinusoid_inp)], axis=-1)[:, None, :]


if __name__ == "__main__":
    key = jax.random.PRNGKey(0)
    k1, _ = jax.random.split(key)

    # --- Test 1: small module-consistent shape (auto dispatch -> jnp fallback). ---
    d_model = 32
    L = 8
    positions = jax.random.randint(k1, (L,), minval=0, maxval=64, dtype=jnp.int32)
    inv_freq = make_inv_freq(d_model)

    pos_emb = xl_positional_embedding(positions, inv_freq)
    jax.block_until_ready(pos_emb)
    ref = _reference(positions, inv_freq)
    assert pos_emb.shape == (L, 1, d_model)
    assert pos_emb.dtype == jnp.float32
    assert jnp.allclose(pos_emb, ref, atol=1e-6), "mismatch vs reference (fallback)"

    # --- Test 2: Pallas kernel, lane-dense path (d_half=128), ragged last block,
    #             2 grid tiles (TL=104, L=200 -> 104 + 96 masked). ---
    d_model2 = 256
    L2 = 200
    positions2 = jnp.arange(L2 - 1, -1, -1, dtype=jnp.int32)  # canonical XL positions
    inv_freq2 = make_inv_freq(d_model2)

    pos_emb2 = xl_positional_embedding(positions2, inv_freq2, use_pallas=True)
    jax.block_until_ready(pos_emb2)
    ref2 = _reference(positions2, inv_freq2)
    assert pos_emb2.shape == (L2, 1, d_model2)
    assert pos_emb2.dtype == jnp.float32
    assert jnp.allclose(pos_emb2, ref2, atol=1e-6), "mismatch vs reference (pallas f32)"

    # --- Test 3: Pallas kernel with bf16 output (half the HBM writeback). ---
    d_model3 = 512
    L3 = 264
    positions3 = jnp.arange(L3 - 1, -1, -1, dtype=jnp.int32)
    inv_freq3 = make_inv_freq(d_model3)

    pos_emb3 = xl_positional_embedding(positions3, inv_freq3,
                                       out_dtype=jnp.bfloat16, use_pallas=True)
    jax.block_until_ready(pos_emb3)
    ref3 = _reference(positions3, inv_freq3)
    assert pos_emb3.shape == (L3, 1, d_model3)
    assert pos_emb3.dtype == jnp.bfloat16
    assert jnp.allclose(pos_emb3.astype(jnp.float32), ref3, atol=1e-2), \
        "mismatch vs reference (pallas bf16)"

    print("KERNEL_OK")
</pallas_src>

<mosaic_0001>
module attributes {stable_mosaic.version = 11 : i64} {
  func.func @_xl_pos_emb_kernel(%arg0: i32, %arg1: memref<104x1xf32, #tpu.memory_space<vmem>>, %arg2: memref<1x128xf32, #tpu.memory_space<vmem>>, %arg3: memref<104x256xf32, #tpu.memory_space<vmem>>) attributes {dimension_semantics = [#tpu.dimension_semantics<parallel>], iteration_bounds = array<i64: 2>, scalar_prefetch = 0 : i64, scratch_operands = 0 : i64, tpu.core_type = #tpu.core_type<tc>, window_params = [{transform_indices = @transform_0, window_bounds = array<i64: 104, 1>}, {pipeline_mode = #tpu.pipeline_mode<synchronous>, transform_indices = @transform_1, window_bounds = array<i64: 1, 128>}, {transform_indices = @transform_2, window_bounds = array<i64: 104, 256>}]} {
    %c0 = arith.constant 0 : index
    %c0_0 = arith.constant 0 : index
    %0 = vector.load %arg1[%c0, %c0_0] : memref<104x1xf32, #tpu.memory_space<vmem>>, vector<104x1xf32>
    %c0_1 = arith.constant 0 : index
    %c0_2 = arith.constant 0 : index
    %1 = vector.load %arg2[%c0_1, %c0_2] : memref<1x128xf32, #tpu.memory_space<vmem>>, vector<1x128xf32>
    %2 = vector.broadcast %0 : vector<104x1xf32> to vector<104x128xf32>
    %3 = vector.broadcast %1 : vector<1x128xf32> to vector<104x128xf32>
    %4 = arith.mulf %2, %3 : vector<104x128xf32>
    %5 = math.sin %4 : vector<104x128xf32>
    %6 = math.cos %4 : vector<104x128xf32>
    %7 = tpu.concatenate %5, %6 in 1 : vector<104x128xf32>, vector<104x128xf32> -> vector<104x256xf32>
    %c0_3 = arith.constant 0 : index
    %c0_4 = arith.constant 0 : index
    %8 = vector.load %arg3[%c0_3, %c0_4] : memref<104x256xf32, #tpu.memory_space<vmem>>, vector<104x256xf32>
    tpu.vector_store %arg3[%c0_3, %c0_4], %7 {strides = array<i32>} : memref<104x256xf32, #tpu.memory_space<vmem>>, vector<104x256xf32>,
    return
  }
  func.func @transform_0(%arg0: i32) -> (i32, i32) {
    %c0_i32 = arith.constant 0 : i32
    %c0_i32_0 = arith.constant 0 : i32
    return %arg0, %c0_i32 : i32, i32
  }
  func.func @transform_1(%arg0: i32) -> (i32, i32) {
    %c0_i32 = arith.constant 0 : i32
    %c0_i32_0 = arith.constant 0 : i32
    %c0_i32_1 = arith.constant 0 : i32
    return %c0_i32, %c0_i32_0 : i32, i32
  }
  func.func @transform_2(%arg0: i32) -> (i32, i32) {
    %c0_i32 = arith.constant 0 : i32
    %c0_i32_0 = arith.constant 0 : i32
    return %arg0, %c0_i32 : i32, i32
  }
}

</mosaic_0001>

<llo_original>
// kernel: tpu_custom_call.1
$region0: #{tpu_custom_call.1}
  #allocation0 [shape = 'u32[]', space=smem, size = 0x4, offset = 0x4, fixed_abs, tag = 'smem constant byte address 0x4 - core index']
  #allocation1 [shape = 'u32[144,128]{1,0:T(1,128)}', space=vmem, size = 0x12000, scoped, tag = 'internal scratch']
  %s0 = inlined_call_operand.vmem [shape: f32[200,1], index: 0, kind: input, shape index: {}]
  %s1 = inlined_call_operand.vmem [shape: f32[1,128], index: 1, kind: input, shape index: {}]
  %s2 = inlined_call_operand.hbm [shape: f32[200,256], index: 2, kind: output, shape index: {}]
  %s3 = sld [smem:[#allocation0]]
  $region41: #{tpu_custom_call.1} parent=0
    _
  %s5 = ssub.s32 1, %s3
  %s6 = scalar_select 0, %s5, %s3
  $region1: #{tpu_custom_call.1} parent=0
    #allocation2 [shape = 'u8[212992]{0}', space=vmem, size = 0x34000, scoped, tag = 'output window, operand 0']
    #allocation3 [shape = 's32[2]{0}', space=sflag, size = 0x8, scoped, tag = 'scoped memory for tpu_custom_call.1']
    %7 = vsyncpa [#allocation3], 0
    %s8 = scalar_lea.sflag [#allocation3], 1
    %9 = vsyncpa %s8, 0
    loop: start=0, step=1, limit=4
    $region2: #{tpu_custom_call.1} parent=1 // loop_pre_header
      _
    $region3: #{tpu_custom_call.1} parent=1 // loop_header
      %s11 = sphi 0, %s15
      %p12 = scmp.ge.s32.totalorder %s11, 4
      %s21 = sphi 0, %s23
      %s24 = sphi 0, %s21
      %s25 = sphi 0, %s24
      %s41 = sphi 0, %s25
      %s45 = sphi 0, %s45
      %s47 = sphi 0, %s45
      %s48 = sphi 0, %s47
      %s62 = sphi 0, %s48
      %s68 = sphi 0, %s70
      %s71 = sphi 0, %s68
      %s72 = sphi 0, %s71
      %s88 = sphi 0, %s72
    $region4: #{tpu_custom_call.1} parent=1 // loop_header_branch
      %14 = sbr.rel (%p12) target = $region8
    $region5: #{tpu_custom_call.1} parent=1 // loop_body
      %s16 = ssub.s32 %s11, 1
      %s17 = ssub.s32 %s11, 2
      %s18 = sadd.s32 %s11, 1
      %s19 = ssub.s32 %s11, %s18
      %p20 = scmp.eq.s32.totalorder %s19, 0
      %s22 = sadd.s32 %s21, 1
      %s23 = scalar_select %p20, %s21, %s22
      %p26 = pneg %p20
      %p27 = scmp.eq.s32.totalorder %s11, 1
      %p28 = por %p26, %p27
      %p29 = scmp.ne.s32.totalorder %s21, %s24
      %p30 = scmp.eq.s32.totalorder %s11, 0
      %p31 = por %p29, %p30
      %p32 = scmp.ne.s32.totalorder %s21, %s24
      %p33 = scmp.eq.s32.totalorder %s16, 1
      %p34 = por %p32, %p33
      %p35 = scmp.ne.s32.totalorder %s24, %s25
      %p36 = scmp.eq.s32.totalorder %s16, 0
      %p37 = por %p35, %p36
      %p38 = scmp.ne.s32.totalorder %s24, %s25
      %p39 = scmp.eq.s32.totalorder %s17, 1
      %p40 = por %p38, %p39
      %p42 = scmp.ne.s32.totalorder %s25, %s41
      %p43 = scmp.eq.s32.totalorder %s17, 0
      %p44 = por %p42, %p43
      %s46 = sadd.s32 %s45, 1
      %p49 = scmp.eq.s32.totalorder %s11, 1
      %p50 = scmp.ne.s32.totalorder %s45, %s47
      %p51 = scmp.eq.s32.totalorder %s11, 0
      %p52 = por %p50, %p51
      %p53 = scmp.ne.s32.totalorder %s45, %s47
      %p54 = scmp.eq.s32.totalorder %s16, 1
      %p55 = por %p53, %p54
      %p56 = scmp.ne.s32.totalorder %s47, %s48
      %p57 = scmp.eq.s32.totalorder %s16, 0
      %p58 = por %p56, %p57
      %p59 = scmp.ne.s32.totalorder %s47, %s48
      %p60 = scmp.eq.s32.totalorder %s17, 1
      %p61 = por %p59, %p60
      %p63 = scmp.ne.s32.totalorder %s48, %s62
      %p64 = scmp.eq.s32.totalorder %s17, 0
      %p65 = por %p63, %p64
      %s66 = ssub.s32 %s11, %s18
      %p67 = scmp.eq.s32.totalorder %s66, 0
      %s69 = sadd.s32 %s68, 1
      %s70 = scalar_select %p67, %s68, %s69
      %p73 = pneg %p67
      %p74 = scmp.eq.s32.totalorder %s11, 1
      %p75 = por %p73, %p74
      %p76 = scmp.ne.s32.totalorder %s68, %s71
      %p77 = scmp.eq.s32.totalorder %s11, 0
      %p78 = por %p76, %p77
      %p79 = scmp.ne.s32.totalorder %s68, %s71
      %p80 = scmp.eq.s32.totalorder %s16, 1
      %p81 = por %p79, %p80
      %p82 = scmp.ne.s32.totalorder %s71, %s72
      %p83 = scmp.eq.s32.totalorder %s16, 0
      %p84 = por %p82, %p83
      %p85 = scmp.ne.s32.totalorder %s71, %s72
      %p86 = scmp.eq.s32.totalorder %s17, 1
      %p87 = por %p85, %p86
      %p89 = scmp.ne.s32.totalorder %s72, %s88
      %p90 = scmp.eq.s32.totalorder %s17, 0
      %p91 = por %p89, %p90
      %p92 = scmp.le.s32.totalorder 1, %s11
      %p93 = scmp.lt.s32.totalorder %s11, 3
      %p94 = pnand %p92, %p93
      %p95 = pneg %p94
      // Predicated region
      $region9: #{tpu_custom_call.1} parent=5 // pred_check
        _
      $region10: #{tpu_custom_call.1} parent=5 // pred_check_branch
        %97 = sbr.rel (%p94) target = $region12
      $region11: #{tpu_custom_call.1} parent=5 // pred_region
        %s98 = ssub.s32 %s11, 1
        // Predicated region
        $region13: #{tpu_custom_call.1} parent=11 // pred_check
          %p99 = pneg %p58
        $region14: #{tpu_custom_call.1} parent=11 // pred_check_branch
          %101 = sbr.rel (%p99) target = $region16
        $region15: #{tpu_custom_call.1} parent=11 // pred_region
          _
        $region16: #{tpu_custom_call.1} parent=11 // pred_fallthru
          _
      $region12: #{tpu_custom_call.1} parent=5 // pred_fallthru
        _
      %p102 = scmp.lt.s32.totalorder %s11, 2
      // Predicated region
      $region17: #{tpu_custom_call.1} parent=5 // pred_check
        %p103 = pneg %p102
      $region18: #{tpu_custom_call.1} parent=5 // pred_check_branch
        %105 = sbr.rel (%p103) target = $region20
      $region19: #{tpu_custom_call.1} parent=5 // pred_region
        // Predicated region
        $region21: #{tpu_custom_call.1} parent=19 // pred_check
          %p106 = pneg %p31
        $region22: #{tpu_custom_call.1} parent=19 // pred_check_branch
          %108 = sbr.rel (%p106) target = $region24
        $region23: #{tpu_custom_call.1} parent=19 // pred_region
          %s109 = smul.u32 13, %s11
          %s110 = ssub.s32 25, %s109
          %p111 = scmp.lt.s32.totalorder %s110, 13
          %s112 = scalar_select %p111, %s110, 13
          %s113 = smul.u32 128, %s112
          %p114 = scmp.lt.s32.totalorder %s109, 24
          %s115 = scalar_select %p114, %s109, 24
          %s116 = smul.addr %s115, 8
          %s117 = scalar_lea.vmem %s0, %s116
          %s118 = smul.u32 13, %s11
          %s119 = ssub.s32 25, %s118
          %p120 = scmp.lt.s32.totalorder %s119, 13
          %s121 = scalar_select %p120, %s119, 13
          %s122 = smul.u32 128, %s121
        $region24: #{tpu_custom_call.1} parent=19 // pred_fallthru
          _
      $region20: #{tpu_custom_call.1} parent=5 // pred_fallthru
        _
      %p123 = scmp.le.s32.totalorder 1, %s11
      %p124 = scmp.lt.s32.totalorder %s11, 3
      %p125 = pnand %p123, %p124
      %p126 = pneg %p125
      // Predicated region
      $region25: #{tpu_custom_call.1} parent=5 // pred_check
        _
      $region26: #{tpu_custom_call.1} parent=5 // pred_check_branch
        %128 = sbr.rel (%p125) target = $region28
      $region27: #{tpu_custom_call.1} parent=5 // pred_region
        %s129 = ssub.s32 %s11, 1
        %s130 = smul.u32 13, %s16
        %s131 = ssub.s32 25, %s130
        %p132 = scmp.lt.s32.totalorder %s131, 13
        %s133 = scalar_select %p132, %s131, 13
        %s134 = smul.u32 128, %s133
        %p135 = scmp.lt.s32.totalorder %s130, 24
        %s136 = scalar_select %p135, %s130, 24
        %s137 = smul.addr %s136, 8
        %s138 = scalar_lea.vmem %s0, %s137
        %p139 = pneg %p37
        %p140 = pneg %p34
        %p141 = pneg %p58
        %p142 = pneg %p55
        %p143 = pneg %p84
        %p144 = pneg %p81
        %s145 = sand.u32 %s71, 1
        %s146 = scalar_lea.sflag [#allocation3], %s145
        %s147 = sand.u32 %s71, 1
        %s148 = smul.addr %s147, 208
        %s149 = scalar_lea.vmem [#allocation2], %s148
        %s150 = smul.u32 13, %s16
        %s151 = ssub.s32 25, %s150
        %p152 = scmp.lt.s32.totalorder %s151, 13
        %s153 = scalar_select %p152, %s151, 13
        %s154 = smul.u32 128, %s153
        %p155 = scmp.lt.s32.totalorder %s150, 24
        %s156 = scalar_select %p155, %s150, 24
        %s157 = smul.addr %s156, 8
        %s158 = scalar_lea.vmem %s0, %s157
        %s159 = smul.u32 13, %s16
        %s160 = ssub.s32 25, %s159
        %p161 = scmp.lt.s32.totalorder %s160, 13
        %s162 = scalar_select %p161, %s160, 13
        %s163 = smul.u32 128, %s162
        %s164 = smul.u32 13, %s16
        %s165 = ssub.s32 25, %s164
        %p166 = scmp.lt.s32.totalorder %s165, 13
        %s167 = scalar_select %p166, %s165, 13
        %s168 = smul.u32 128, %s167
        %s169 = smul.u32 %s168, 2
        %v170 = vld [vmem:[%s158] sm:$0xff]
        %v171 = vld [vmem:[%s158 + $0x8] sm:$0xff]
        %v172 = vld [vmem:[%s158 + $0x10] sm:$0xff]
        %v173 = vld [vmem:[%s158 + $0x18] sm:$0xff]
        %v174 = vld [vmem:[%s158 + $0x20] sm:$0xff]
        %v175 = vld [vmem:[%s158 + $0x28] sm:$0xff]
        %v176 = vld [vmem:[%s158 + $0x30] sm:$0xff]
        %v177 = vld [vmem:[%s158 + $0x38] sm:$0xff]
        %v178 = vld [vmem:[%s158 + $0x40] sm:$0xff]
        %v179 = vld [vmem:[%s158 + $0x48] sm:$0xff]
        %v180 = vld [vmem:[%s158 + $0x50] sm:$0xff]
        %v181 = vld [vmem:[%s158 + $0x58] sm:$0xff]
        %v182 = vld [vmem:[%s158 + $0x60] sm:$0xff]
        %v183 = vld [vmem:[%s1] sm:$0x1]
        %185 = vset.pattern.permute.xlu0 0
        %186 = vperm.xlu0 %185, %v170
        %v187 = vpop.permute.xlu0 %186
        %190 = vset.pattern.permute.xlu0 0
        %191 = vperm.xlu0 %190, %v171
        %v192 = vpop.permute.xlu0 %191
        %195 = vset.pattern.permute.xlu0 0
        %196 = vperm.xlu0 %195, %v172
        %v197 = vpop.permute.xlu0 %196
        %200 = vset.pattern.permute.xlu0 0
        %201 = vperm.xlu0 %200, %v173
        %v202 = vpop.permute.xlu0 %201
        %205 = vset.pattern.permute.xlu0 0
        %206 = vperm.xlu0 %205, %v174
        %v207 = vpop.permute.xlu0 %206
        %210 = vset.pattern.permute.xlu0 0
        %211 = vperm.xlu0 %210, %v175
        %v212 = vpop.permute.xlu0 %211
        %215 = vset.pattern.permute.xlu0 0
        %216 = vperm.xlu0 %215, %v176
        %v217 = vpop.permute.xlu0 %216
        %220 = vset.pattern.permute.xlu0 0
        %221 = vperm.xlu0 %220, %v177
        %v222 = vpop.permute.xlu0 %221
        %225 = vset.pattern.permute.xlu0 0
        %226 = vperm.xlu0 %225, %v178
        %v227 = vpop.permute.xlu0 %226
        %230 = vset.pattern.permute.xlu0 0
        %231 = vperm.xlu0 %230, %v179
        %v232 = vpop.permute.xlu0 %231
        %235 = vset.pattern.permute.xlu0 0
        %236 = vperm.xlu0 %235, %v180
        %v237 = vpop.permute.xlu0 %236
        %240 = vset.pattern.permute.xlu0 0
        %241 = vperm.xlu0 %240, %v181
        %v242 = vpop.permute.xlu0 %241
        %245 = vset.pattern.permute.xlu0 0
        %246 = vperm.xlu0 %245, %v182
        %v247 = vpop.permute.xlu0 %246
        %v250 = vlaneseq
        %v251 = vshrl.u32 %v250, 7
        %v252 = vsub.s32 0, %v251
        %v253 = vrot.slane %v183, %v252
        %v255 = vmul.f32 %v187, %v253
        %v256 = vmul.f32 %v192, %v253
        %v257 = vmul.f32 %v197, %v253
        %v258 = vmul.f32 %v202, %v253
        %v259 = vmul.f32 %v207, %v253
        %v260 = vmul.f32 %v212, %v253
        %v261 = vmul.f32 %v217, %v253
        %v262 = vmul.f32 %v222, %v253
        %v263 = vmul.f32 %v227, %v253
        %v264 = vmul.f32 %v232, %v253
        %v265 = vmul.f32 %v237, %v253
        %v266 = vmul.f32 %v242, %v253
        %v267 = vmul.f32 %v247, %v253
        %v268 = vand.u32 2147483647, %v255
        %vm269 = vcmp.le.f32.partialorder %v268, 0.7853982
        %vm270 = vcmp.lt.s32.totalorder %v255, 0
        %v271 = vand.u32 %v255, 2139095040
        %v272 = vshrl.u32 %v271, 23
        %v273 = vsub.s32 %v272, 127
        %v274 = vand.u32 2147483647, %v255
        %v275 = vand.u32 %v274, 8388607
        %v276 = vor.u32 %v275, 8388608
        %v277 = vsub.s32 0, %v276
        %v278 = vadd.s32 %v273, 1
        %vm279 = vcmp.gt.s32.totalorder %v278, 0
        %v280 = vsel %vm279, %v278, 0
        %v281 = vshrl.u32 %v280, 5
        %v282 = vand.u32 %v280, 31
        %v283 = vsub.s32 32, %v282
        %v284 = vshrl.u32 683565275, %v283
        %v285 = vshll.u32 683565275, %v282
        %v286 = vshrl.u32 2475754826, %v283
        %v287 = vor.u32 %v285, %v286
        %v288 = vshll.u32 2475754826, %v282
        %v289 = vshrl.u32 2131351028, %v283
        %v290 = vor.u32 %v288, %v289
        %v291 = vshll.u32 2131351028, %v282
        %v292 = vshrl.u32 2102212464, %v283
        %v293 = vor.u32 %v291, %v292
        %v294 = vshll.u32 2102212464, %v282
        %v295 = vshrl.u32 920167782, %v283
        %v296 = vor.u32 %v294, %v295
        %v297 = vshll.u32 920167782, %v282
        %v298 = vshrl.u32 1326507024, %v283
        %v299 = vor.u32 %v297, %v298
        %vm300 = vcmp.lt.s32.totalorder %v281, 1
        %vm301 = vcmp.lt.s32.totalorder %v281, 2
        %vm302 = vcmp.lt.s32.totalorder %v281, 3
        %vm303 = vcmp.lt.s32.totalorder %v281, 4
        %v304 = vsel %vm300, %v284, %v287
        %v305 = vsel %vm303, %v293, 2102212464
        %v306 = vsel %vm302, %v290, %v305
        %v307 = vsel %vm301, %v304, %v306
        %v308 = vsel %vm300, %v287, %v290
        %v309 = vsel %vm303, %v296, 920167782
        %v310 = vsel %vm302, %v293, %v309
        %v311 = vsel %vm301, %v308, %v310
        %v312 = vsel %vm300, %v290, %v293
        %v313 = vsel %vm303, %v299, 1326507024
        %v314 = vsel %vm302, %v296, %v313
        %v315 = vsel %vm301, %v312, %v314
        %v316 = vshll.u32 %v276, 8
        %v317 = vmul.u32.u64.compose %v316, %v315
        %v318 = vextract.low.u32 %v317
        %v319 = vextract.high.u32 %v317
        %v320 = vmul.u32.u64.compose %v316, %v311
        %v321 = vextract.low.u32 %v320
        %v322 = vextract.high.u32 %v320
        %v323 = vmul.u32 %v316, %v307
        %v324 = vadd.s32 %v319, %v321
        %vm325 = vc.u32 %v319, %v321
        %v326 = vadd.s32 %v322, 1
        %v327 = vsel %vm325, %v326, %v322
        %v328 = vadd.s32 %v323, %v327
        %v329 = vadd.s32 %v328, 536870912
        %v330 = vshrl.u32 %v329, 30
        %v331 = vshll.u32 %v330, 30
        %v332 = vsub.s32 %v328, %v331
        %vm333 = vcmp.lt.s32.totalorder %v332, 0
        %v334 = vsub.s32 0, %v332
        %v335 = vsel %vm333, %v334, %v332
        %v336 = vclz %v335
        %v337 = vsub.s32 %v336, 2
        %vm338 = vcmp.gt.s32.totalorder 0, %v337
        %v339 = vsel %vm338, 0, %v337
        %v340 = vsub.s32 32, %v339
        %v341 = vshll.u32 %v332, %v339
        %v342 = vshrl.u32 %v324, %v340
        %v343 = vor.u32 %v341, %v342
        %v344 = vsub.s32 4294967266, %v339
        %v345 = vadd.s32 %v344, 127
        %v346 = vshll.u32 %v345, 23
        %v347 = vor.u32 4788187, %v346
        %v348 = vand.u32 2147483647, %v347
        %v350 = vcvt.s32.f32 %v343
        %v351 = vmul.f32 %v350, %v348
        %v352 = vxor.u32 %v351, 2147483648
        %v353 = vsel %vm270, %v352, %v351
        %v354 = vsub.s32 4, %v330
        %v355 = vsel %vm270, %v354, %v330
        %v356 = vsel %vm269, %v255, %v353
        %v357 = vsel %vm269, 0, %v355
        %v358 = vcosq.f32.pop %v356
        %v359 = vsinq.f32.pop %v356
        %vm360 = vweird.f32 %v255
        %v361 = vadd.s32 %v357, 3
        %v362 = vand.u32 %v361, 3
        %vm363 = vcmp.lt.s32.totalorder %v362, 2
        %vm364 = vcmp.eq.s32.totalorder %v362, 0
        %v365 = vxor.u32 %v359, 2147483648
        %v366 = vsel %vm364, %v358, %v365
        %vm367 = vcmp.eq.s32.totalorder %v362, 2
        %v368 = vxor.u32 %v358, 2147483648
        %v369 = vsel %vm367, %v368, %v359
        %v370 = vsel %vm363, %v366, %v369
        %v371 = vsel %vm360, nan, %v370
        %v372 = vand.u32 2147483647, %v256
        %vm373 = vcmp.le.f32.partialorder %v372, 0.7853982
        %vm374 = vcmp.lt.s32.totalorder %v256, 0
        %v375 = vand.u32 %v256, 2139095040
        %v376 = vshrl.u32 %v375, 23
        %v377 = vsub.s32 %v376, 127
        %v378 = vand.u32 2147483647, %v256
        %v379 = vand.u32 %v378, 8388607
        %v380 = vor.u32 %v379, 8388608
        %v381 = vsub.s32 0, %v380
        %v382 = vadd.s32 %v377, 1
        %vm383 = vcmp.gt.s32.totalorder %v382, 0
        %v384 = vsel %vm383, %v382, 0
        %v385 = vshrl.u32 %v384, 5
        %v386 = vand.u32 %v384, 31
        %v387 = vsub.s32 32, %v386
        %v388 = vshrl.u32 683565275, %v387
        %v389 = vshll.u32 683565275, %v386
        %v390 = vshrl.u32 2475754826, %v387
        %v391 = vor.u32 %v389, %v390
        %v392 = vshll.u32 2475754826, %v386
        %v393 = vshrl.u32 2131351028, %v387
        %v394 = vor.u32 %v392, %v393
        %v395 = vshll.u32 2131351028, %v386
        %v396 = vshrl.u32 2102212464, %v387
        %v397 = vor.u32 %v395, %v396
        %v398 = vshll.u32 2102212464, %v386
        %v399 = vshrl.u32 920167782, %v387
        %v400 = vor.u32 %v398, %v399
        %v401 = vshll.u32 920167782, %v386
        %v402 = vshrl.u32 1326507024, %v387
        %v403 = vor.u32 %v401, %v402
        %vm404 = vcmp.lt.s32.totalorder %v385, 1
        %vm405 = vcmp.lt.s32.totalorder %v385, 2
        %vm406 = vcmp.lt.s32.totalorder %v385, 3
        %vm407 = vcmp.lt.s32.totalorder %v385, 4
        %v408 = vsel %vm404, %v388, %v391
        %v409 = vsel %vm407, %v397, 2102212464
        %v410 = vsel %vm406, %v394, %v409
        %v411 = vsel %vm405, %v408, %v410
        %v412 = vsel %vm404, %v391, %v394
        %v413 = vsel %vm407, %v400, 920167782
        %v414 = vsel %vm406, %v397, %v413
        %v415 = vsel %vm405, %v412, %v414
        %v416 = vsel %vm404, %v394, %v397
        %v417 = vsel %vm407, %v403, 1326507024
        %v418 = vsel %vm406, %v400, %v417
        %v419 = vsel %vm405, %v416, %v418
        %v420 = vshll.u32 %v380, 8
        %v421 = vmul.u32.u64.compose %v420, %v419
        %v422 = vextract.low.u32 %v421
        %v423 = vextract.high.u32 %v421
        %v424 = vmul.u32.u64.compose %v420, %v415
        %v425 = vextract.low.u32 %v424
        %v426 = vextract.high.u32 %v424
        %v427 = vmul.u32 %v420, %v411
        %v428 = vadd.s32 %v423, %v425
        %vm429 = vc.u32 %v423, %v425
        %v430 = vadd.s32 %v426, 1
        %v431 = vsel %vm429, %v430, %v426
        %v432 = vadd.s32 %v427, %v431
        %v433 = vadd.s32 %v432, 536870912
        %v434 = vshrl.u32 %v433, 30
        %v435 = vshll.u32 %v434, 30
        %v436 = vsub.s32 %v432, %v435
        %vm437 = vcmp.lt.s32.totalorder %v436, 0
        %v438 = vsub.s32 0, %v436
        %v439 = vsel %vm437, %v438, %v436
        %v440 = vclz %v439
        %v441 = vsub.s32 %v440, 2
        %vm442 = vcmp.gt.s32.totalorder 0, %v441
        %v443 = vsel %vm442, 0, %v441
        %v444 = vsub.s32 32, %v443
        %v445 = vshll.u32 %v436, %v443
        %v446 = vshrl.u32 %v428, %v444
        %v447 = vor.u32 %v445, %v446
        %v448 = vsub.s32 4294967266, %v443
        %v449 = vadd.s32 %v448, 127
        %v450 = vshll.u32 %v449, 23
        %v451 = vor.u32 4788187, %v450
        %v452 = vand.u32 2147483647, %v451
        %v454 = vcvt.s32.f32 %v447
        %v455 = vmul.f32 %v454, %v452
        %v456 = vxor.u32 %v455, 2147483648
        %v457 = vsel %vm374, %v456, %v455
        %v458 = vsub.s32 4, %v434
        %v459 = vsel %vm374, %v458, %v434
        %v460 = vsel %vm373, %v256, %v457
        %v461 = vsel %vm373, 0, %v459
        %v462 = vcosq.f32.pop %v460
        %v463 = vsinq.f32.pop %v460
        %vm464 = vweird.f32 %v256
        %v465 = vadd.s32 %v461, 3
        %v466 = vand.u32 %v465, 3
        %vm467 = vcmp.lt.s32.totalorder %v466, 2
        %vm468 = vcmp.eq.s32.totalorder %v466, 0
        %v469 = vxor.u32 %v463, 2147483648
        %v470 = vsel %vm468, %v462, %v469
        %vm471 = vcmp.eq.s32.totalorder %v466, 2
        %v472 = vxor.u32 %v462, 2147483648
        %v473 = vsel %vm471, %v472, %v463
        %v474 = vsel %vm467, %v470, %v473
        %v475 = vsel %vm464, nan, %v474
        %v476 = vand.u32 2147483647, %v257
        %vm477 = vcmp.le.f32.partialorder %v476, 0.7853982
        %vm478 = vcmp.lt.s32.totalorder %v257, 0
        %v479 = vand.u32 %v257, 2139095040
        %v480 = vshrl.u32 %v479, 23
        %v481 = vsub.s32 %v480, 127
        %v482 = vand.u32 2147483647, %v257
        %v483 = vand.u32 %v482, 8388607
        %v484 = vor.u32 %v483, 8388608
        %v485 = vsub.s32 0, %v484
        %v486 = vadd.s32 %v481, 1
        %vm487 = vcmp.gt.s32.totalorder %v486, 0
        %v488 = vsel %vm487, %v486, 0
        %v489 = vshrl.u32 %v488, 5
        %v490 = vand.u32 %v488, 31
        %v491 = vsub.s32 32, %v490
        %v492 = vshrl.u32 683565275, %v491
        %v493 = vshll.u32 683565275, %v490
        %v494 = vshrl.u32 2475754826, %v491
        %v495 = vor.u32 %v493, %v494
        %v496 = vshll.u32 2475754826, %v490
        %v497 = vshrl.u32 2131351028, %v491
        %v498 = vor.u32 %v496, %v497
        %v499 = vshll.u32 2131351028, %v490
        %v500 = vshrl.u32 2102212464, %v491
        %v501 = vor.u32 %v499, %v500
        %v502 = vshll.u32 2102212464, %v490
        %v503 = vshrl.u32 920167782, %v491
        %v504 = vor.u32 %v502, %v503
        %v505 = vshll.u32 920167782, %v490
        %v506 = vshrl.u32 1326507024, %v491
        %v507 = vor.u32 %v505, %v506
        %vm508 = vcmp.lt.s32.totalorder %v489, 1
        %vm509 = vcmp.lt.s32.totalorder %v489, 2
        %vm510 = vcmp.lt.s32.totalorder %v489, 3
        %vm511 = vcmp.lt.s32.totalorder %v489, 4
        %v512 = vsel %vm508, %v492, %v495
        %v513 = vsel %vm511, %v501, 2102212464
        %v514 = vsel %vm510, %v498, %v513
        %v515 = vsel %vm509, %v512, %v514
        %v516 = vsel %vm508, %v495, %v498
        %v517 = vsel %vm511, %v504, 920167782
        %v518 = vsel %vm510, %v501, %v517
        %v519 = vsel %vm509, %v516, %v518
        %v520 = vsel %vm508, %v498, %v501
        %v521 = vsel %vm511, %v507, 1326507024
        %v522 = vsel %vm510, %v504, %v521
        %v523 = vsel %vm509, %v520, %v522
        %v524 = vshll.u32 %v484, 8
        %v525 = vmul.u32.u64.compose %v524, %v523
        %v526 = vextract.low.u32 %v525
        %v527 = vextract.high.u32 %v525
        %v528 = vmul.u32.u64.compose %v524, %v519
        %v529 = vextract.low.u32 %v528
        %v530 = vextract.high.u32 %v528
        %v531 = vmul.u32 %v524, %v515
        %v532 = vadd.s32 %v527, %v529
        %vm533 = vc.u32 %v527, %v529
        %v534 = vadd.s32 %v530, 1
        %v535 = vsel %vm533, %v534, %v530
        %v536 = vadd.s32 %v531, %v535
        %v537 = vadd.s32 %v536, 536870912
        %v538 = vshrl.u32 %v537, 30
        %v539 = vshll.u32 %v538, 30
        %v540 = vsub.s32 %v536, %v539
        %vm541 = vcmp.lt.s32.totalorder %v540, 0
        %v542 = vsub.s32 0, %v540
        %v543 = vsel %vm541, %v542, %v540
        %v544 = vclz %v543
        %v545 = vsub.s32 %v544, 2
        %vm546 = vcmp.gt.s32.totalorder 0, %v545
        %v547 = vsel %vm546, 0, %v545
        %v548 = vsub.s32 32, %v547
        %v549 = vshll.u32 %v540, %v547
        %v550 = vshrl.u32 %v532, %v548
        %v551 = vor.u32 %v549, %v550
        %v552 = vsub.s32 4294967266, %v547
        %v553 = vadd.s32 %v552, 127
        %v554 = vshll.u32 %v553, 23
        %v555 = vor.u32 4788187, %v554
        %v556 = vand.u32 2147483647, %v555
        %v558 = vcvt.s32.f32 %v551
        %v559 = vmul.f32 %v558, %v556
        %v560 = vxor.u32 %v559, 2147483648
        %v561 = vsel %vm478, %v560, %v559
        %v562 = vsub.s32 4, %v538
        %v563 = vsel %vm478, %v562, %v538
        %v564 = vsel %vm477, %v257, %v561
        %v565 = vsel %vm477, 0, %v563
        %v566 = vcosq.f32.pop %v564
        %v567 = vsinq.f32.pop %v564
        %vm568 = vweird.f32 %v257
        %v569 = vadd.s32 %v565, 3
        %v570 = vand.u32 %v569, 3
        %vm571 = vcmp.lt.s32.totalorder %v570, 2
        %vm572 = vcmp.eq.s32.totalorder %v570, 0
        %v573 = vxor.u32 %v567, 2147483648
        %v574 = vsel %vm572, %v566, %v573
        %vm575 = vcmp.eq.s32.totalorder %v570, 2
        %v576 = vxor.u32 %v566, 2147483648
        %v577 = vsel %vm575, %v576, %v567
        %v578 = vsel %vm571, %v574, %v577
        %v579 = vsel %vm568, nan, %v578
        %v580 = vand.u32 2147483647, %v258
        %vm581 = vcmp.le.f32.partialorder %v580, 0.7853982
        %vm582 = vcmp.lt.s32.totalorder %v258, 0
        %v583 = vand.u32 %v258, 2139095040
        %v584 = vshrl.u32 %v583, 23
        %v585 = vsub.s32 %v584, 127
        %v586 = vand.u32 2147483647, %v258
        %v587 = vand.u32 %v586, 8388607
        %v588 = vor.u32 %v587, 8388608
        %v589 = vsub.s32 0, %v588
        %v590 = vadd.s32 %v585, 1
        %vm591 = vcmp.gt.s32.totalorder %v590, 0
        %v592 = vsel %vm591, %v590, 0
        %v593 = vshrl.u32 %v592, 5
        %v594 = vand.u32 %v592, 31
        %v595 = vsub.s32 32, %v594
        %v596 = vshrl.u32 683565275, %v595
        %v597 = vshll.u32 683565275, %v594
        %v598 = vshrl.u32 2475754826, %v595
        %v599 = vor.u32 %v597, %v598
        %v600 = vshll.u32 2475754826, %v594
        %v601 = vshrl.u32 2131351028, %v595
        %v602 = vor.u32 %v600, %v601
        %v603 = vshll.u32 2131351028, %v594
        %v604 = vshrl.u32 2102212464, %v595
        %v605 = vor.u32 %v603, %v604
        %v606 = vshll.u32 2102212464, %v594
        %v607 = vshrl.u32 920167782, %v595
        %v608 = vor.u32 %v606, %v607
        %v609 = vshll.u32 920167782, %v594
        %v610 = vshrl.u32 1326507024, %v595
        %v611 = vor.u32 %v609, %v610
        %vm612 = vcmp.lt.s32.totalorder %v593, 1
        %vm613 = vcmp.lt.s32.totalorder %v593, 2
        %vm614 = vcmp.lt.s32.totalorder %v593, 3
        %vm615 = vcmp.lt.s32.totalorder %v593, 4
        %v616 = vsel %vm612, %v596, %v599
        %v617 = vsel %vm615, %v605, 2102212464
        %v618 = vsel %vm614, %v602, %v617
        %v619 = vsel %vm613, %v616, %v618
        %v620 = vsel %vm612, %v599, %v602
        %v621 = vsel %vm615, %v608, 920167782
        %v622 = vsel %vm614, %v605, %v621
        %v623 = vsel %vm613, %v620, %v622
        %v624 = vsel %vm612, %v602, %v605
        %v625 = vsel %vm615, %v611, 1326507024
        %v626 = vsel %vm614, %v608, %v625
        %v627 = vsel %vm613, %v624, %v626
        %v628 = vshll.u32 %v588, 8
        %v629 = vmul.u32.u64.compose %v628, %v627
        %v630 = vextract.low.u32 %v629
        %v631 = vextract.high.u32 %v629
        %v632 = vmul.u32.u64.compose %v628, %v623
        %v633 = vextract.low.u32 %v632
        %v634 = vextract.high.u32 %v632
        %v635 = vmul.u32 %v628, %v619
        %v636 = vadd.s32 %v631, %v633
        %vm637 = vc.u32 %v631, %v633
        %v638 = vadd.s32 %v634, 1
        %v639 = vsel %vm637, %v638, %v634
        %v640 = vadd.s32 %v635, %v639
        %v641 = vadd.s32 %v640, 536870912
        %v642 = vshrl.u32 %v641, 30
        %v643 = vshll.u32 %v642, 30
        %v644 = vsub.s32 %v640, %v643
        %vm645 = vcmp.lt.s32.totalorder %v644, 0
        %v646 = vsub.s32 0, %v644
        %v647 = vsel %vm645, %v646, %v644
        %v648 = vclz %v647
        %v649 = vsub.s32 %v648, 2
        %vm650 = vcmp.gt.s32.totalorder 0, %v649
        %v651 = vsel %vm650, 0, %v649
        %v652 = vsub.s32 32, %v651
        %v653 = vshll.u32 %v644, %v651
        %v654 = vshrl.u32 %v636, %v652
        %v655 = vor.u32 %v653, %v654
        %v656 = vsub.s32 4294967266, %v651
        %v657 = vadd.s32 %v656, 127
        %v658 = vshll.u32 %v657, 23
        %v659 = vor.u32 4788187, %v658
        %v660 = vand.u32 2147483647, %v659
        %v662 = vcvt.s32.f32 %v655
        %v663 = vmul.f32 %v662, %v660
        %v664 = vxor.u32 %v663, 2147483648
        %v665 = vsel %vm582, %v664, %v663
        %v666 = vsub.s32 4, %v642
        %v667 = vsel %vm582, %v666, %v642
        %v668 = vsel %vm581, %v258, %v665
        %v669 = vsel %vm581, 0, %v667
        %v670 = vcosq.f32.pop %v668
        %v671 = vsinq.f32.pop %v668
        %vm672 = vweird.f32 %v258
        %v673 = vadd.s32 %v669, 3
        %v674 = vand.u32 %v673, 3
        %vm675 = vcmp.lt.s32.totalorder %v674, 2
        %vm676 = vcmp.eq.s32.totalorder %v674, 0
        %v677 = vxor.u32 %v671, 2147483648
        %v678 = vsel %vm676, %v670, %v677
        %vm679 = vcmp.eq.s32.totalorder %v674, 2
        %v680 = vxor.u32 %v670, 2147483648
        %v681 = vsel %vm679, %v680, %v671
        %v682 = vsel %vm675, %v678, %v681
        %v683 = vsel %vm672, nan, %v682
        %v684 = vand.u32 2147483647, %v259
        %vm685 = vcmp.le.f32.partialorder %v684, 0.7853982
        %vm686 = vcmp.lt.s32.totalorder %v259, 0
        %v687 = vand.u32 %v259, 2139095040
        %v688 = vshrl.u32 %v687, 23
        %v689 = vsub.s32 %v688, 127
        %v690 = vand.u32 2147483647, %v259
        %v691 = vand.u32 %v690, 8388607
        %v692 = vor.u32 %v691, 8388608
        %v693 = vsub.s32 0, %v692
        %v694 = vadd.s32 %v689, 1
        %vm695 = vcmp.gt.s32.totalorder %v694, 0
        %v696 = vsel %vm695, %v694, 0
        %v697 = vshrl.u32 %v696, 5
        %v698 = vand.u32 %v696, 31
        %v699 = vsub.s32 32, %v698
        %v700 = vshrl.u32 683565275, %v699
        %v701 = vshll.u32 683565275, %v698
        %v702 = vshrl.u32 2475754826, %v699
        %v703 = vor.u32 %v701, %v702
        %v704 = vshll.u32 2475754826, %v698
        %v705 = vshrl.u32 2131351028, %v699
        %v706 = vor.u32 %v704, %v705
        %v707 = vshll.u32 2131351028, %v698
        %v708 = vshrl.u32 2102212464, %v699
        %v709 = vor.u32 %v707, %v708
        %v710 = vshll.u32 2102212464, %v698
        %v711 = vshrl.u32 920167782, %v699
        %v712 = vor.u32 %v710, %v711
        %v713 = vshll.u32 920167782, %v698
        %v714 = vshrl.u32 1326507024, %v699
        %v715 = vor.u32 %v713, %v714
        %vm716 = vcmp.lt.s32.totalorder %v697, 1
        %vm717 = vcmp.lt.s32.totalorder %v697, 2
        %vm718 = vcmp.lt.s32.totalorder %v697, 3
        %vm719 = vcmp.lt.s32.totalorder %v697, 4
        %v720 = vsel %vm716, %v700, %v703
        %v721 = vsel %vm719, %v709, 2102212464
        %v722 = vsel %vm718, %v706, %v721
        %v723 = vsel %vm717, %v720, %v722
        %v724 = vsel %vm716, %v703, %v706
        %v725 = vsel %vm719, %v712, 920167782
        %v726 = vsel %vm718, %v709, %v725
        %v727 = vsel %vm717, %v724, %v726
        %v728 = vsel %vm716, %v706, %v709
        %v729 = vsel %vm719, %v715, 1326507024
        %v730 = vsel %vm718, %v712, %v729
        %v731 = vsel %vm717, %v728, %v730
        %v732 = vshll.u32 %v692, 8
        %v733 = vmul.u32.u64.compose %v732, %v731
        %v734 = vextract.low.u32 %v733
        %v735 = vextract.high.u32 %v733
        %v736 = vmul.u32.u64.compose %v732, %v727
        %v737 = vextract.low.u32 %v736
        %v738 = vextract.high.u32 %v736
        %v739 = vmul.u32 %v732, %v723
        %v740 = vadd.s32 %v735, %v737
        %vm741 = vc.u32 %v735, %v737
        %v742 = vadd.s32 %v738, 1
        %v743 = vsel %vm741, %v742, %v738
        %v744 = vadd.s32 %v739, %v743
        %v745 = vadd.s32 %v744, 536870912
        %v746 = vshrl.u32 %v745, 30
        %v747 = vshll.u32 %v746, 30
        %v748 = vsub.s32 %v744, %v747
        %vm749 = vcmp.lt.s32.totalorder %v748, 0
        %v750 = vsub.s32 0, %v748
        %v751 = vsel %vm749, %v750, %v748
        %v752 = vclz %v751
        %v753 = vsub.s32 %v752, 2
        %vm754 = vcmp.gt.s32.totalorder 0, %v753
        %v755 = vsel %vm754, 0, %v753
        %v756 = vsub.s32 32, %v755
        %v757 = vshll.u32 %v748, %v755
        %v758 = vshrl.u32 %v740, %v756
        %v759 = vor.u32 %v757, %v758
        %v760 = vsub.s32 4294967266, %v755
        %v761 = vadd.s32 %v760, 127
        %v762 = vshll.u32 %v761, 23
        %v763 = vor.u32 4788187, %v762
        %v764 = vand.u32 2147483647, %v763
        %v766 = vcvt.s32.f32 %v759
        %v767 = vmul.f32 %v766, %v764
        %v768 = vxor.u32 %v767, 2147483648
        %v769 = vsel %vm686, %v768, %v767
        %v770 = vsub.s32 4, %v746
        %v771 = vsel %vm686, %v770, %v746
        %v772 = vsel %vm685, %v259, %v769
        %v773 = vsel %vm685, 0, %v771
        %v774 = vcosq.f32.pop %v772
        %v775 = vsinq.f32.pop %v772
        %vm776 = vweird.f32 %v259
        %v777 = vadd.s32 %v773, 3
        %v778 = vand.u32 %v777, 3
        %vm779 = vcmp.lt.s32.totalorder %v778, 2
        %vm780 = vcmp.eq.s32.totalorder %v778, 0
        %v781 = vxor.u32 %v775, 2147483648
        %v782 = vsel %vm780, %v774, %v781
        %vm783 = vcmp.eq.s32.totalorder %v778, 2
        %v784 = vxor.u32 %v774, 2147483648
        %v785 = vsel %vm783, %v784, %v775
        %v786 = vsel %vm779, %v782, %v785
        %v787 = vsel %vm776, nan, %v786
        %v788 = vand.u32 2147483647, %v260
        %vm789 = vcmp.le.f32.partialorder %v788, 0.7853982
        %vm790 = vcmp.lt.s32.totalorder %v260, 0
        %v791 = vand.u32 %v260, 2139095040
        %v792 = vshrl.u32 %v791, 23
        %v793 = vsub.s32 %v792, 127
        %v794 = vand.u32 2147483647, %v260
        %v795 = vand.u32 %v794, 8388607
        %v796 = vor.u32 %v795, 8388608
        %v797 = vsub.s32 0, %v796
        %v798 = vadd.s32 %v793, 1
        %vm799 = vcmp.gt.s32.totalorder %v798, 0
        %v800 = vsel %vm799, %v798, 0
        %v801 = vshrl.u32 %v800, 5
        %v802 = vand.u32 %v800, 31
        %v803 = vsub.s32 32, %v802
        %v804 = vshrl.u32 683565275, %v803
        %v805 = vshll.u32 683565275, %v802
        %v806 = vshrl.u32 2475754826, %v803
        %v807 = vor.u32 %v805, %v806
        %v808 = vshll.u32 2475754826, %v802
        %v809 = vshrl.u32 2131351028, %v803
        %v810 = vor.u32 %v808, %v809
        %v811 = vshll.u32 2131351028, %v802
        %v812 = vshrl.u32 2102212464, %v803
        %v813 = vor.u32 %v811, %v812
        %v814 = vshll.u32 2102212464, %v802
        %v815 = vshrl.u32 920167782, %v803
        %v816 = vor.u32 %v814, %v815
        %v817 = vshll.u32 920167782, %v802
        %v818 = vshrl.u32 1326507024, %v803
        %v819 = vor.u32 %v817, %v818
        %vm820 = vcmp.lt.s32.totalorder %v801, 1
        %vm821 = vcmp.lt.s32.totalorder %v801, 2
        %vm822 = vcmp.lt.s32.totalorder %v801, 3
        %vm823 = vcmp.lt.s32.totalorder %v801, 4
        %v824 = vsel %vm820, %v804, %v807
        %v825 = vsel %vm823, %v813, 2102212464
        %v826 = vsel %vm822, %v810, %v825
        %v827 = vsel %vm821, %v824, %v826
        %v828 = vsel %vm820, %v807, %v810
        %v829 = vsel %vm823, %v816, 920167782
        %v830 = vsel %vm822, %v813, %v829
        %v831 = vsel %vm821, %v828, %v830
        %v832 = vsel %vm820, %v810, %v813
        %v833 = vsel %vm823, %v819, 1326507024
        %v834 = vsel %vm822, %v816, %v833
        %v835 = vsel %vm821, %v832, %v834
        %v836 = vshll.u32 %v796, 8
        %v837 = vmul.u32.u64.compose %v836, %v835
        %v838 = vextract.low.u32 %v837
        %v839 = vextract.high.u32 %v837
        %v840 = vmul.u32.u64.compose %v836, %v831
        %v841 = vextract.low.u32 %v840
        %v842 = vextract.high.u32 %v840
        %v843 = vmul.u32 %v836, %v827
        %v844 = vadd.s32 %v839, %v841
        %vm845 = vc.u32 %v839, %v841
        %v846 = vadd.s32 %v842, 1
        %v847 = vsel %vm845, %v846, %v842
        %v848 = vadd.s32 %v843, %v847
        %v849 = vadd.s32 %v848, 536870912
        %v850 = vshrl.u32 %v849, 30
        %v851 = vshll.u32 %v850, 30
        %v852 = vsub.s32 %v848, %v851
        %vm853 = vcmp.lt.s32.totalorder %v852, 0
        %v854 = vsub.s32 0, %v852
        %v855 = vsel %vm853, %v854, %v852
        %v856 = vclz %v855
        %v857 = vsub.s32 %v856, 2
        %vm858 = vcmp.gt.s32.totalorder 0, %v857
        %v859 = vsel %vm858, 0, %v857
        %v860 = vsub.s32 32, %v859
        %v861 = vshll.u32 %v852, %v859
        %v862 = vshrl.u32 %v844, %v860
        %v863 = vor.u32 %v861, %v862
        %v864 = vsub.s32 4294967266, %v859
        %v865 = vadd.s32 %v864, 127
        %v866 = vshll.u32 %v865, 23
        %v867 = vor.u32 4788187, %v866
        %v868 = vand.u32 2147483647, %v867
        %v870 = vcvt.s32.f32 %v863
        %v871 = vmul.f32 %v870, %v868
        %v872 = vxor.u32 %v871, 2147483648
        %v873 = vsel %vm790, %v872, %v871
        %v874 = vsub.s32 4, %v850
        %v875 = vsel %vm790, %v874, %v850
        %v876 = vsel %vm789, %v260, %v873
        %v877 = vsel %vm789, 0, %v875
        %v878 = vcosq.f32.pop %v876
        %v879 = vsinq.f32.pop %v876
        %vm880 = vweird.f32 %v260
        %v881 = vadd.s32 %v877, 3
        %v882 = vand.u32 %v881, 3
        %vm883 = vcmp.lt.s32.totalorder %v882, 2
        %vm884 = vcmp.eq.s32.totalorder %v882, 0
        %v885 = vxor.u32 %v879, 2147483648
        %v886 = vsel %vm884, %v878, %v885
        %vm887 = vcmp.eq.s32.totalorder %v882, 2
        %v888 = vxor.u32 %v878, 2147483648
        %v889 = vsel %vm887, %v888, %v879
        %v890 = vsel %vm883, %v886, %v889
        %v891 = vsel %vm880, nan, %v890
        %v892 = vand.u32 2147483647, %v261
        %vm893 = vcmp.le.f32.partialorder %v892, 0.7853982
        %vm894 = vcmp.lt.s32.totalorder %v261, 0
        %v895 = vand.u32 %v261, 2139095040
        %v896 = vshrl.u32 %v895, 23
        %v897 = vsub.s32 %v896, 127
        %v898 = vand.u32 2147483647, %v261
        %v899 = vand.u32 %v898, 8388607
        %v900 = vor.u32 %v899, 8388608
        %v901 = vsub.s32 0, %v900
        %v902 = vadd.s32 %v897, 1
        %vm903 = vcmp.gt.s32.totalorder %v902, 0
        %v904 = vsel %vm903, %v902, 0
        %v905 = vshrl.u32 %v904, 5
        %v906 = vand.u32 %v904, 31
        %v907 = vsub.s32 32, %v906
        %v908 = vshrl.u32 683565275, %v907
        %v909 = vshll.u32 683565275, %v906
        %v910 = vshrl.u32 2475754826, %v907
        %v911 = vor.u32 %v909, %v910
        %v912 = vshll.u32 2475754826, %v906
        %v913 = vshrl.u32 2131351028, %v907
        %v914 = vor.u32 %v912, %v913
        %v915 = vshll.u32 2131351028, %v906
        %v916 = vshrl.u32 2102212464, %v907
        %v917 = vor.u32 %v915, %v916
        %v918 = vshll.u32 2102212464, %v906
        %v919 = vshrl.u32 920167782, %v907
        %v920 = vor.u32 %v918, %v919
        %v921 = vshll.u32 920167782, %v906
        %v922 = vshrl.u32 1326507024, %v907
        %v923 = vor.u32 %v921, %v922
        %vm924 = vcmp.lt.s32.totalorder %v905, 1
        %vm925 = vcmp.lt.s32.totalorder %v905, 2
        %vm926 = vcmp.lt.s32.totalorder %v905, 3
        %vm927 = vcmp.lt.s32.totalorder %v905, 4
        %v928 = vsel %vm924, %v908, %v911
        %v929 = vsel %vm927, %v917, 2102212464
        %v930 = vsel %vm926, %v914, %v929
        %v931 = vsel %vm925, %v928, %v930
        %v932 = vsel %vm924, %v911, %v914
        %v933 = vsel %vm927, %v920, 920167782
        %v934 = vsel %vm926, %v917, %v933
        %v935 = vsel %vm925, %v932, %v934
        %v936 = vsel %vm924, %v914, %v917
        %v937 = vsel %vm927, %v923, 1326507024
        %v938 = vsel %vm926, %v920, %v937
        %v939 = vsel %vm925, %v936, %v938
        %v940 = vshll.u32 %v900, 8
        %v941 = vmul.u32.u64.compose %v940, %v939
        %v942 = vextract.low.u32 %v941
        %v943 = vextract.high.u32 %v941
        %v944 = vmul.u32.u64.compose %v940, %v935
        %v945 = vextract.low.u32 %v944
        %v946 = vextract.high.u32 %v944
        %v947 = vmul.u32 %v940, %v931
        %v948 = vadd.s32 %v943, %v945
        %vm949 = vc.u32 %v943, %v945
        %v950 = vadd.s32 %v946, 1
        %v951 = vsel %vm949, %v950, %v946
        %v952 = vadd.s32 %v947, %v951
        %v953 = vadd.s32 %v952, 536870912
        %v954 = vshrl.u32 %v953, 30
        %v955 = vshll.u32 %v954, 30
        %v956 = vsub.s32 %v952, %v955
        %vm957 = vcmp.lt.s32.totalorder %v956, 0
        %v958 = vsub.s32 0, %v956
        %v959 = vsel %vm957, %v958, %v956
        %v960 = vclz %v959
        %v961 = vsub.s32 %v960, 2
        %vm962 = vcmp.gt.s32.totalorder 0, %v961
        %v963 = vsel %vm962, 0, %v961
        %v964 = vsub.s32 32, %v963
        %v965 = vshll.u32 %v956, %v963
        %v966 = vshrl.u32 %v948, %v964
        %v967 = vor.u32 %v965, %v966
        %v968 = vsub.s32 4294967266, %v963
        %v969 = vadd.s32 %v968, 127
        %v970 = vshll.u32 %v969, 23
        %v971 = vor.u32 4788187, %v970
        %v972 = vand.u32 2147483647, %v971
        %v974 = vcvt.s32.f32 %v967
        %v975 = vmul.f32 %v974, %v972
        %v976 = vxor.u32 %v975, 2147483648
        %v977 = vsel %vm894, %v976, %v975
        %v978 = vsub.s32 4, %v954
        %v979 = vsel %vm894, %v978, %v954
        %v980 = vsel %vm893, %v261, %v977
        %v981 = vsel %vm893, 0, %v979
        %v982 = vcosq.f32.pop %v980
        %v983 = vsinq.f32.pop %v980
        %vm984 = vweird.f32 %v261
        %v985 = vadd.s32 %v981, 3
        %v986 = vand.u32 %v985, 3
        %vm987 = vcmp.lt.s32.totalorder %v986, 2
        %vm988 = vcmp.eq.s32.totalorder %v986, 0
        %v989 = vxor.u32 %v983, 2147483648
        %v990 = vsel %vm988, %v982, %v989
        %vm991 = vcmp.eq.s32.totalorder %v986, 2
        %v992 = vxor.u32 %v982, 2147483648
        %v993 = vsel %vm991, %v992, %v983
        %v994 = vsel %vm987, %v990, %v993
        %v995 = vsel %vm984, nan, %v994
        %v996 = vand.u32 2147483647, %v262
        %vm997 = vcmp.le.f32.partialorder %v996, 0.7853982
        %vm998 = vcmp.lt.s32.totalorder %v262, 0
        %v999 = vand.u32 %v262, 2139095040
        %v1000 = vshrl.u32 %v999, 23
        %v1001 = vsub.s32 %v1000, 127
        %v1002 = vand.u32 2147483647, %v262
        %v1003 = vand.u32 %v1002, 8388607
        %v1004 = vor.u32 %v1003, 8388608
        %v1005 = vsub.s32 0, %v1004
        %v1006 = vadd.s32 %v1001, 1
        %vm1007 = vcmp.gt.s32.totalorder %v1006, 0
        %v1008 = vsel %vm1007, %v1006, 0
        %v1009 = vshrl.u32 %v1008, 5
        %v1010 = vand.u32 %v1008, 31
        %v1011 = vsub.s32 32, %v1010
        %v1012 = vshrl.u32 683565275, %v1011
        %v1013 = vshll.u32 683565275, %v1010
        %v1014 = vshrl.u32 2475754826, %v1011
        %v1015 = vor.u32 %v1013, %v1014
        %v1016 = vshll.u32 2475754826, %v1010
        %v1017 = vshrl.u32 2131351028, %v1011
        %v1018 = vor.u32 %v1016, %v1017
        %v1019 = vshll.u32 2131351028, %v1010
        %v1020 = vshrl.u32 2102212464, %v1011
        %v1021 = vor.u32 %v1019, %v1020
        %v1022 = vshll.u32 2102212464, %v1010
        %v1023 = vshrl.u32 920167782, %v1011
        %v1024 = vor.u32 %v1022, %v1023
        %v1025 = vshll.u32 920167782, %v1010
        %v1026 = vshrl.u32 1326507024, %v1011
        %v1027 = vor.u32 %v1025, %v1026
        %vm1028 = vcmp.lt.s32.totalorder %v1009, 1
        %vm1029 = vcmp.lt.s32.totalorder %v1009, 2
        %vm1030 = vcmp.lt.s32.totalorder %v1009, 3
        %vm1031 = vcmp.lt.s32.totalorder %v1009, 4
        %v1032 = vsel %vm1028, %v1012, %v1015
        %v1033 = vsel %vm1031, %v1021, 2102212464
        %v1034 = vsel %vm1030, %v1018, %v1033
        %v1035 = vsel %vm1029, %v1032, %v1034
        %v1036 = vsel %vm1028, %v1015, %v1018
        %v1037 = vsel %vm1031, %v1024, 920167782
        %v1038 = vsel %vm1030, %v1021, %v1037
        %v1039 = vsel %vm1029, %v1036, %v1038
        %v1040 = vsel %vm1028, %v1018, %v1021
        %v1041 = vsel %vm1031, %v1027, 1326507024
        %v1042 = vsel %vm1030, %v1024, %v1041
        %v1043 = vsel %vm1029, %v1040, %v1042
        %v1044 = vshll.u32 %v1004, 8
        %v1045 = vmul.u32.u64.compose %v1044, %v1043
        %v1046 = vextract.low.u32 %v1045
        %v1047 = vextract.high.u32 %v1045
        %v1048 = vmul.u32.u64.compose %v1044, %v1039
        %v1049 = vextract.low.u32 %v1048
        %v1050 = vextract.high.u32 %v1048
        %v1051 = vmul.u32 %v1044, %v1035
        %v1052 = vadd.s32 %v1047, %v1049
        %vm1053 = vc.u32 %v1047, %v1049
        %v1054 = vadd.s32 %v1050, 1
        %v1055 = vsel %vm1053, %v1054, %v1050
        %v1056 = vadd.s32 %v1051, %v1055
        %v1057 = vadd.s32 %v1056, 536870912
        %v1058 = vshrl.u32 %v1057, 30
        %v1059 = vshll.u32 %v1058, 30
        %v1060 = vsub.s32 %v1056, %v1059
        %vm1061 = vcmp.lt.s32.totalorder %v1060, 0
        %v1062 = vsub.s32 0, %v1060
        %v1063 = vsel %vm1061, %v1062, %v1060
        %v1064 = vclz %v1063
        %v1065 = vsub.s32 %v1064, 2
        %vm1066 = vcmp.gt.s32.totalorder 0, %v1065
        %v1067 = vsel %vm1066, 0, %v1065
        %v1068 = vsub.s32 32, %v1067
        %v1069 = vshll.u32 %v1060, %v1067
        %v1070 = vshrl.u32 %v1052, %v1068
        %v1071 = vor.u32 %v1069, %v1070
        %v1072 = vsub.s32 4294967266, %v1067
        %v1073 = vadd.s32 %v1072, 127
        %v1074 = vshll.u32 %v1073, 23
        %v1075 = vor.u32 4788187, %v1074
        %v1076 = vand.u32 2147483647, %v1075
        %v1078 = vcvt.s32.f32 %v1071
        %v1079 = vmul.f32 %v1078, %v1076
        %v1080 = vxor.u32 %v1079, 2147483648
        %v1081 = vsel %vm998, %v1080, %v1079
        %v1082 = vsub.s32 4, %v1058
        %v1083 = vsel %vm998, %v1082, %v1058
        %v1084 = vsel %vm997, %v262, %v1081
        %v1085 = vsel %vm997, 0, %v1083
        %v1086 = vcosq.f32.pop %v1084
        %v1087 = vsinq.f32.pop %v1084
        %vm1088 = vweird.f32 %v262
        %v1089 = vadd.s32 %v1085, 3
        %v1090 = vand.u32 %v1089, 3
        %vm1091 = vcmp.lt.s32.totalorder %v1090, 2
        %vm1092 = vcmp.eq.s32.totalorder %v1090, 0
        %v1093 = vxor.u32 %v1087, 2147483648
        %v1094 = vsel %vm1092, %v1086, %v1093
        %vm1095 = vcmp.eq.s32.totalorder %v1090, 2
        %v1096 = vxor.u32 %v1086, 2147483648
        %v1097 = vsel %vm1095, %v1096, %v1087
        %v1098 = vsel %vm1091, %v1094, %v1097
        %v1099 = vsel %vm1088, nan, %v1098
        %v1100 = vand.u32 2147483647, %v263
        %vm1101 = vcmp.le.f32.partialorder %v1100, 0.7853982
        %vm1102 = vcmp.lt.s32.totalorder %v263, 0
        %v1103 = vand.u32 %v263, 2139095040
        %v1104 = vshrl.u32 %v1103, 23
        %v1105 = vsub.s32 %v1104, 127
        %v1106 = vand.u32 2147483647, %v263
        %v1107 = vand.u32 %v1106, 8388607
        %v1108 = vor.u32 %v1107, 8388608
        %v1109 = vsub.s32 0, %v1108
        %v1110 = vadd.s32 %v1105, 1
        %vm1111 = vcmp.gt.s32.totalorder %v1110, 0
        %v1112 = vsel %vm1111, %v1110, 0
        %v1113 = vshrl.u32 %v1112, 5
        %v1114 = vand.u32 %v1112, 31
        %v1115 = vsub.s32 32, %v1114
        %v1116 = vshrl.u32 683565275, %v1115
        %v1117 = vshll.u32 683565275, %v1114
        %v1118 = vshrl.u32 2475754826, %v1115
        %v1119 = vor.u32 %v1117, %v1118
        %v1120 = vshll.u32 2475754826, %v1114
        %v1121 = vshrl.u32 2131351028, %v1115
        %v1122 = vor.u32 %v1120, %v1121
        %v1123 = vshll.u32 2131351028, %v1114
        %v1124 = vshrl.u32 2102212464, %v1115
        %v1125 = vor.u32 %v1123, %v1124
        %v1126 = vshll.u32 2102212464, %v1114
        %v1127 = vshrl.u32 920167782, %v1115
        %v1128 = vor.u32 %v1126, %v1127
        %v1129 = vshll.u32 920167782, %v1114
        %v1130 = vshrl.u32 1326507024, %v1115
        %v1131 = vor.u32 %v1129, %v1130
        %vm1132 = vcmp.lt.s32.totalorder %v1113, 1
        %vm1133 = vcmp.lt.s32.totalorder %v1113, 2
        %vm1134 = vcmp.lt.s32.totalorder %v1113, 3
        %vm1135 = vcmp.lt.s32.totalorder %v1113, 4
        %v1136 = vsel %vm1132, %v1116, %v1119
        %v1137 = vsel %vm1135, %v1125, 2102212464
        %v1138 = vsel %vm1134, %v1122, %v1137
        %v1139 = vsel %vm1133, %v1136, %v1138
        %v1140 = vsel %vm1132, %v1119, %v1122
        %v1141 = vsel %vm1135, %v1128, 920167782
        %v1142 = vsel %vm1134, %v1125, %v1141
        %v1143 = vsel %vm1133, %v1140, %v1142
        %v1144 = vsel %vm1132, %v1122, %v1125
        %v1145 = vsel %vm1135, %v1131, 1326507024
        %v1146 = vsel %vm1134, %v1128, %v1145
        %v1147 = vsel %vm1133, %v1144, %v1146
        %v1148 = vshll.u32 %v1108, 8
        %v1149 = vmul.u32.u64.compose %v1148, %v1147
        %v1150 = vextract.low.u32 %v1149
        %v1151 = vextract.high.u32 %v1149
        %v1152 = vmul.u32.u64.compose %v1148, %v1143
        %v1153 = vextract.low.u32 %v1152
        %v1154 = vextract.high.u32 %v1152
        %v1155 = vmul.u32 %v1148, %v1139
        %v1156 = vadd.s32 %v1151, %v1153
        %vm1157 = vc.u32 %v1151, %v1153
        %v1158 = vadd.s32 %v1154, 1
        %v1159 = vsel %vm1157, %v1158, %v1154
        %v1160 = vadd.s32 %v1155, %v1159
        %v1161 = vadd.s32 %v1160, 536870912
        %v1162 = vshrl.u32 %v1161, 30
        %v1163 = vshll.u32 %v1162, 30
        %v1164 = vsub.s32 %v1160, %v1163
        %vm1165 = vcmp.lt.s32.totalorder %v1164, 0
        %v1166 = vsub.s32 0, %v1164
        %v1167 = vsel %vm1165, %v1166, %v1164
        %v1168 = vclz %v1167
        %v1169 = vsub.s32 %v1168, 2
        %vm1170 = vcmp.gt.s32.totalorder 0, %v1169
        %v1171 = vsel %vm1170, 0, %v1169
        %v1172 = vsub.s32 32, %v1171
        %v1173 = vshll.u32 %v1164, %v1171
        %v1174 = vshrl.u32 %v1156, %v1172
        %v1175 = vor.u32 %v1173, %v1174
        %v1176 = vsub.s32 4294967266, %v1171
        %v1177 = vadd.s32 %v1176, 127
        %v1178 = vshll.u32 %v1177, 23
        %v1179 = vor.u32 4788187, %v1178
        %v1180 = vand.u32 2147483647, %v1179
        %v1182 = vcvt.s32.f32 %v1175
        %v1183 = vmul.f32 %v1182, %v1180
        %v1184 = vxor.u32 %v1183, 2147483648
        %v1185 = vsel %vm1102, %v1184, %v1183
        %v1186 = vsub.s32 4, %v1162
        %v1187 = vsel %vm1102, %v1186, %v1162
        %v1188 = vsel %vm1101, %v263, %v1185
        %v1189 = vsel %vm1101, 0, %v1187
        %v1190 = vcosq.f32.pop %v1188
        %v1191 = vsinq.f32.pop %v1188
        %vm1192 = vweird.f32 %v263
        %v1193 = vadd.s32 %v1189, 3
        %v1194 = vand.u32 %v1193, 3
        %vm1195 = vcmp.lt.s32.totalorder %v1194, 2
        %vm1196 = vcmp.eq.s32.totalorder %v1194, 0
        %v1197 = vxor.u32 %v1191, 2147483648
        %v1198 = vsel %vm1196, %v1190, %v1197
        %vm1199 = vcmp.eq.s32.totalorder %v1194, 2
        %v1200 = vxor.u32 %v1190, 2147483648
        %v1201 = vsel %vm1199, %v1200, %v1191
        %v1202 = vsel %vm1195, %v1198, %v1201
        %v1203 = vsel %vm1192, nan, %v1202
        %v1204 = vand.u32 2147483647, %v264
        %vm1205 = vcmp.le.f32.partialorder %v1204, 0.7853982
        %vm1206 = vcmp.lt.s32.totalorder %v264, 0
        %v1207 = vand.u32 %v264, 2139095040
        %v1208 = vshrl.u32 %v1207, 23
        %v1209 = vsub.s32 %v1208, 127
        %v1210 = vand.u32 2147483647, %v264
        %v1211 = vand.u32 %v1210, 8388607
        %v1212 = vor.u32 %v1211, 8388608
        %v1213 = vsub.s32 0, %v1212
        %v1214 = vadd.s32 %v1209, 1
        %vm1215 = vcmp.gt.s32.totalorder %v1214, 0
        %v1216 = vsel %vm1215, %v1214, 0
        %v1217 = vshrl.u32 %v1216, 5
        %v1218 = vand.u32 %v1216, 31
        %v1219 = vsub.s32 32, %v1218
        %v1220 = vshrl.u32 683565275, %v1219
        %v1221 = vshll.u32 683565275, %v1218
        %v1222 = vshrl.u32 2475754826, %v1219
        %v1223 = vor.u32 %v1221, %v1222
        %v1224 = vshll.u32 2475754826, %v1218
        %v1225 = vshrl.u32 2131351028, %v1219
        %v1226 = vor.u32 %v1224, %v1225
        %v1227 = vshll.u32 2131351028, %v1218
        %v1228 = vshrl.u32 2102212464, %v1219
        %v1229 = vor.u32 %v1227, %v1228
        %v1230 = vshll.u32 2102212464, %v1218
        %v1231 = vshrl.u32 920167782, %v1219
        %v1232 = vor.u32 %v1230, %v1231
        %v1233 = vshll.u32 920167782, %v1218
        %v1234 = vshrl.u32 1326507024, %v1219
        %v1235 = vor.u32 %v1233, %v1234
        %vm1236 = vcmp.lt.s32.totalorder %v1217, 1
        %vm1237 = vcmp.lt.s32.totalorder %v1217, 2
        %vm1238 = vcmp.lt.s32.totalorder %v1217, 3
        %vm1239 = vcmp.lt.s32.totalorder %v1217, 4
        %v1240 = vsel %vm1236, %v1220, %v1223
        %v1241 = vsel %vm1239, %v1229, 2102212464
        %v1242 = vsel %vm1238, %v1226, %v1241
        %v1243 = vsel %vm1237, %v1240, %v1242
        %v1244 = vsel %vm1236, %v1223, %v1226
        %v1245 = vsel %vm1239, %v1232, 920167782
        %v1246 = vsel %vm1238, %v1229, %v1245
        %v1247 = vsel %vm1237, %v1244, %v1246
        %v1248 = vsel %vm1236, %v1226, %v1229
        %v1249 = vsel %vm1239, %v1235, 1326507024
        %v1250 = vsel %vm1238, %v1232, %v1249
        %v1251 = vsel %vm1237, %v1248, %v1250
        %v1252 = vshll.u32 %v1212, 8
        %v1253 = vmul.u32.u64.compose %v1252, %v1251
        %v1254 = vextract.low.u32 %v1253
        %v1255 = vextract.high.u32 %v1253
        %v1256 = vmul.u32.u64.compose %v1252, %v1247
        %v1257 = vextract.low.u32 %v1256
        %v1258 = vextract.high.u32 %v1256
        %v1259 = vmul.u32 %v1252, %v1243
        %v1260 = vadd.s32 %v1255, %v1257
        %vm1261 = vc.u32 %v1255, %v1257
        %v1262 = vadd.s32 %v1258, 1
        %v1263 = vsel %vm1261, %v1262, %v1258
        %v1264 = vadd.s32 %v1259, %v1263
        %v1265 = vadd.s32 %v1264, 536870912
        %v1266 = vshrl.u32 %v1265, 30
        %v1267 = vshll.u32 %v1266, 30
        %v1268 = vsub.s32 %v1264, %v1267
        %vm1269 = vcmp.lt.s32.totalorder %v1268, 0
        %v1270 = vsub.s32 0, %v1268
        %v1271 = vsel %vm1269, %v1270, %v1268
        %v1272 = vclz %v1271
        %v1273 = vsub.s32 %v1272, 2
        %vm1274 = vcmp.gt.s32.totalorder 0, %v1273
        %v1275 = vsel %vm1274, 0, %v1273
        %v1276 = vsub.s32 32, %v1275
        %v1277 = vshll.u32 %v1268, %v1275
        %v1278 = vshrl.u32 %v1260, %v1276
        %v1279 = vor.u32 %v1277, %v1278
        %v1280 = vsub.s32 4294967266, %v1275
        %v1281 = vadd.s32 %v1280, 127
        %v1282 = vshll.u32 %v1281, 23
        %v1283 = vor.u32 4788187, %v1282
        %v1284 = vand.u32 2147483647, %v1283
        %v1286 = vcvt.s32.f32 %v1279
        %v1287 = vmul.f32 %v1286, %v1284
        %v1288 = vxor.u32 %v1287, 2147483648
        %v1289 = vsel %vm1206, %v1288, %v1287
        %v1290 = vsub.s32 4, %v1266
        %v1291 = vsel %vm1206, %v1290, %v1266
        %v1292 = vsel %vm1205, %v264, %v1289
        %v1293 = vsel %vm1205, 0, %v1291
        %v1294 = vcosq.f32.pop %v1292
        %v1295 = vsinq.f32.pop %v1292
        %vm1296 = vweird.f32 %v264
        %v1297 = vadd.s32 %v1293, 3
        %v1298 = vand.u32 %v1297, 3
        %vm1299 = vcmp.lt.s32.totalorder %v1298, 2
        %vm1300 = vcmp.eq.s32.totalorder %v1298, 0
        %v1301 = vxor.u32 %v1295, 2147483648
        %v1302 = vsel %vm1300, %v1294, %v1301
        %vm1303 = vcmp.eq.s32.totalorder %v1298, 2
        %v1304 = vxor.u32 %v1294, 2147483648
        %v1305 = vsel %vm1303, %v1304, %v1295
        %v1306 = vsel %vm1299, %v1302, %v1305
        %v1307 = vsel %vm1296, nan, %v1306
        %v1308 = vand.u32 2147483647, %v265
        %vm1309 = vcmp.le.f32.partialorder %v1308, 0.7853982
        %vm1310 = vcmp.lt.s32.totalorder %v265, 0
        %v1311 = vand.u32 %v265, 2139095040
        %v1312 = vshrl.u32 %v1311, 23
        %v1313 = vsub.s32 %v1312, 127
        %v1314 = vand.u32 2147483647, %v265
        %v1315 = vand.u32 %v1314, 8388607
        %v1316 = vor.u32 %v1315, 8388608
        %v1317 = vsub.s32 0, %v1316
        %v1318 = vadd.s32 %v1313, 1
        %vm1319 = vcmp.gt.s32.totalorder %v1318, 0
        %v1320 = vsel %vm1319, %v1318, 0
        %v1321 = vshrl.u32 %v1320, 5
        %v1322 = vand.u32 %v1320, 31
        %v1323 = vsub.s32 32, %v1322
        %v1324 = vshrl.u32 683565275, %v1323
        %v1325 = vshll.u32 683565275, %v1322
        %v1326 = vshrl.u32 2475754826, %v1323
        %v1327 = vor.u32 %v1325, %v1326
        %v1328 = vshll.u32 2475754826, %v1322
        %v1329 = vshrl.u32 2131351028, %v1323
        %v1330 = vor.u32 %v1328, %v1329
        %v1331 = vshll.u32 2131351028, %v1322
        %v1332 = vshrl.u32 2102212464, %v1323
        %v1333 = vor.u32 %v1331, %v1332
        %v1334 = vshll.u32 2102212464, %v1322
        %v1335 = vshrl.u32 920167782, %v1323
        %v1336 = vor.u32 %v1334, %v1335
        %v1337 = vshll.u32 920167782, %v1322
        %v1338 = vshrl.u32 1326507024, %v1323
        %v1339 = vor.u32 %v1337, %v1338
        %vm1340 = vcmp.lt.s32.totalorder %v1321, 1
        %vm1341 = vcmp.lt.s32.totalorder %v1321, 2
        %vm1342 = vcmp.lt.s32.totalorder %v1321, 3
        %vm1343 = vcmp.lt.s32.totalorder %v1321, 4
        %v1344 = vsel %vm1340, %v1324, %v1327
        %v1345 = vsel %vm1343, %v1333, 2102212464
        %v1346 = vsel %vm1342, %v1330, %v1345
        %v1347 = vsel %vm1341, %v1344, %v1346
        %v1348 = vsel %vm1340, %v1327, %v1330
        %v1349 = vsel %vm1343, %v1336, 920167782
        %v1350 = vsel %vm1342, %v1333, %v1349
        %v1351 = vsel %vm1341, %v1348, %v1350
        %v1352 = vsel %vm1340, %v1330, %v1333
        %v1353 = vsel %vm1343, %v1339, 1326507024
        %v1354 = vsel %vm1342, %v1336, %v1353
        %v1355 = vsel %vm1341, %v1352, %v1354
        %v1356 = vshll.u32 %v1316, 8
        %v1357 = vmul.u32.u64.compose %v1356, %v1355
        %v1358 = vextract.low.u32 %v1357
        %v1359 = vextract.high.u32 %v1357
        %v1360 = vmul.u32.u64.compose %v1356, %v1351
        %v1361 = vextract.low.u32 %v1360
        %v1362 = vextract.high.u32 %v1360
        %v1363 = vmul.u32 %v1356, %v1347
        %v1364 = vadd.s32 %v1359, %v1361
        %vm1365 = vc.u32 %v1359, %v1361
        %v1366 = vadd.s32 %v1362, 1
        %v1367 = vsel %vm1365, %v1366, %v1362
        %v1368 = vadd.s32 %v1363, %v1367
        %v1369 = vadd.s32 %v1368, 536870912
        %v1370 = vshrl.u32 %v1369, 30
        %v1371 = vshll.u32 %v1370, 30
        %v1372 = vsub.s32 %v1368, %v1371
        %vm1373 = vcmp.lt.s32.totalorder %v1372, 0
        %v1374 = vsub.s32 0, %v1372
        %v1375 = vsel %vm1373, %v1374, %v1372
        %v1376 = vclz %v1375
        %v1377 = vsub.s32 %v1376, 2
        %vm1378 = vcmp.gt.s32.totalorder 0, %v1377
        %v1379 = vsel %vm1378, 0, %v1377
        %v1380 = vsub.s32 32, %v1379
        %v1381 = vshll.u32 %v1372, %v1379
        %v1382 = vshrl.u32 %v1364, %v1380
        %v1383 = vor.u32 %v1381, %v1382
        %v1384 = vsub.s32 4294967266, %v1379
        %v1385 = vadd.s32 %v1384, 127
        %v1386 = vshll.u32 %v1385, 23
        %v1387 = vor.u32 4788187, %v1386
        %v1388 = vand.u32 2147483647, %v1387
        %v1390 = vcvt.s32.f32 %v1383
        %v1391 = vmul.f32 %v1390, %v1388
        %v1392 = vxor.u32 %v1391, 2147483648
        %v1393 = vsel %vm1310, %v1392, %v1391
        %v1394 = vsub.s32 4, %v1370
        %v1395 = vsel %vm1310, %v1394, %v1370
        %v1396 = vsel %vm1309, %v265, %v1393
        %v1397 = vsel %vm1309, 0, %v1395
        %v1398 = vcosq.f32.pop %v1396
        %v1399 = vsinq.f32.pop %v1396
        %vm1400 = vweird.f32 %v265
        %v1401 = vadd.s32 %v1397, 3
        %v1402 = vand.u32 %v1401, 3
        %vm1403 = vcmp.lt.s32.totalorder %v1402, 2
        %vm1404 = vcmp.eq.s32.totalorder %v1402, 0
        %v1405 = vxor.u32 %v1399, 2147483648
        %v1406 = vsel %vm1404, %v1398, %v1405
        %vm1407 = vcmp.eq.s32.totalorder %v1402, 2
        %v1408 = vxor.u32 %v1398, 2147483648
        %v1409 = vsel %vm1407, %v1408, %v1399
        %v1410 = vsel %vm1403, %v1406, %v1409
        %v1411 = vsel %vm1400, nan, %v1410
        %v1412 = vand.u32 2147483647, %v266
        %vm1413 = vcmp.le.f32.partialorder %v1412, 0.7853982
        %vm1414 = vcmp.lt.s32.totalorder %v266, 0
        %v1415 = vand.u32 %v266, 2139095040
        %v1416 = vshrl.u32 %v1415, 23
        %v1417 = vsub.s32 %v1416, 127
        %v1418 = vand.u32 2147483647, %v266
        %v1419 = vand.u32 %v1418, 8388607
        %v1420 = vor.u32 %v1419, 8388608
        %v1421 = vsub.s32 0, %v1420
        %v1422 = vadd.s32 %v1417, 1
        %vm1423 = vcmp.gt.s32.totalorder %v1422, 0
        %v1424 = vsel %vm1423, %v1422, 0
        %v1425 = vshrl.u32 %v1424, 5
        %v1426 = vand.u32 %v1424, 31
        %v1427 = vsub.s32 32, %v1426
        %v1428 = vshrl.u32 683565275, %v1427
        %v1429 = vshll.u32 683565275, %v1426
        %v1430 = vshrl.u32 2475754826, %v1427
        %v1431 = vor.u32 %v1429, %v1430
        %v1432 = vshll.u32 2475754826, %v1426
        %v1433 = vshrl.u32 2131351028, %v1427
        %v1434 = vor.u32 %v1432, %v1433
        %v1435 = vshll.u32 2131351028, %v1426
        %v1436 = vshrl.u32 2102212464, %v1427
        %v1437 = vor.u32 %v1435, %v1436
        %v1438 = vshll.u32 2102212464, %v1426
        %v1439 = vshrl.u32 920167782, %v1427
        %v1440 = vor.u32 %v1438, %v1439
        %v1441 = vshll.u32 920167782, %v1426
        %v1442 = vshrl.u32 1326507024, %v1427
        %v1443 = vor.u32 %v1441, %v1442
        %vm1444 = vcmp.lt.s32.totalorder %v1425, 1
        %vm1445 = vcmp.lt.s32.totalorder %v1425, 2
        %vm1446 = vcmp.lt.s32.totalorder %v1425, 3
        %vm1447 = vcmp.lt.s32.totalorder %v1425, 4
        %v1448 = vsel %vm1444, %v1428, %v1431
        %v1449 = vsel %vm1447, %v1437, 2102212464
        %v1450 = vsel %vm1446, %v1434, %v1449
        %v1451 = vsel %vm1445, %v1448, %v1450
        %v1452 = vsel %vm1444, %v1431, %v1434
        %v1453 = vsel %vm1447, %v1440, 920167782
        %v1454 = vsel %vm1446, %v1437, %v1453
        %v1455 = vsel %vm1445, %v1452, %v1454
        %v1456 = vsel %vm1444, %v1434, %v1437
        %v1457 = vsel %vm1447, %v1443, 1326507024
        %v1458 = vsel %vm1446, %v1440, %v1457
        %v1459 = vsel %vm1445, %v1456, %v1458
        %v1460 = vshll.u32 %v1420, 8
        %v1461 = vmul.u32.u64.compose %v1460, %v1459
        %v1462 = vextract.low.u32 %v1461
        %v1463 = vextract.high.u32 %v1461
        %v1464 = vmul.u32.u64.compose %v1460, %v1455
        %v1465 = vextract.low.u32 %v1464
        %v1466 = vextract.high.u32 %v1464
        %v1467 = vmul.u32 %v1460, %v1451
        %v1468 = vadd.s32 %v1463, %v1465
        %vm1469 = vc.u32 %v1463, %v1465
        %v1470 = vadd.s32 %v1466, 1
        %v1471 = vsel %vm1469, %v1470, %v1466
        %v1472 = vadd.s32 %v1467, %v1471
        %v1473 = vadd.s32 %v1472, 536870912
        %v1474 = vshrl.u32 %v1473, 30
        %v1475 = vshll.u32 %v1474, 30
        %v1476 = vsub.s32 %v1472, %v1475
        %vm1477 = vcmp.lt.s32.totalorder %v1476, 0
        %v1478 = vsub.s32 0, %v1476
        %v1479 = vsel %vm1477, %v1478, %v1476
        %v1480 = vclz %v1479
        %v1481 = vsub.s32 %v1480, 2
        %vm1482 = vcmp.gt.s32.totalorder 0, %v1481
        %v1483 = vsel %vm1482, 0, %v1481
        %v1484 = vsub.s32 32, %v1483
        %v1485 = vshll.u32 %v1476, %v1483
        %v1486 = vshrl.u32 %v1468, %v1484
        %v1487 = vor.u32 %v1485, %v1486
        %v1488 = vsub.s32 4294967266, %v1483
        %v1489 = vadd.s32 %v1488, 127
        %v1490 = vshll.u32 %v1489, 23
        %v1491 = vor.u32 4788187, %v1490
        %v1492 = vand.u32 2147483647, %v1491
        %v1494 = vcvt.s32.f32 %v1487
        %v1495 = vmul.f32 %v1494, %v1492
        %v1496 = vxor.u32 %v1495, 2147483648
        %v1497 = vsel %vm1414, %v1496, %v1495
        %v1498 = vsub.s32 4, %v1474
        %v1499 = vsel %vm1414, %v1498, %v1474
        %v1500 = vsel %vm1413, %v266, %v1497
        %v1501 = vsel %vm1413, 0, %v1499
        %v1502 = vcosq.f32.pop %v1500
        %v1503 = vsinq.f32.pop %v1500
        %vm1504 = vweird.f32 %v266
        %v1505 = vadd.s32 %v1501, 3
        %v1506 = vand.u32 %v1505, 3
        %vm1507 = vcmp.lt.s32.totalorder %v1506, 2
        %vm1508 = vcmp.eq.s32.totalorder %v1506, 0
        %v1509 = vxor.u32 %v1503, 2147483648
        %v1510 = vsel %vm1508, %v1502, %v1509
        %vm1511 = vcmp.eq.s32.totalorder %v1506, 2
        %v1512 = vxor.u32 %v1502, 2147483648
        %v1513 = vsel %vm1511, %v1512, %v1503
        %v1514 = vsel %vm1507, %v1510, %v1513
        %v1515 = vsel %vm1504, nan, %v1514
        %v1516 = vand.u32 2147483647, %v267
        %vm1517 = vcmp.le.f32.partialorder %v1516, 0.7853982
        %vm1518 = vcmp.lt.s32.totalorder %v267, 0
        %v1519 = vand.u32 %v267, 2139095040
        %v1520 = vshrl.u32 %v1519, 23
        %v1521 = vsub.s32 %v1520, 127
        %v1522 = vand.u32 2147483647, %v267
        %v1523 = vand.u32 %v1522, 8388607
        %v1524 = vor.u32 %v1523, 8388608
        %v1525 = vsub.s32 0, %v1524
        %v1526 = vadd.s32 %v1521, 1
        %vm1527 = vcmp.gt.s32.totalorder %v1526, 0
        %v1528 = vsel %vm1527, %v1526, 0
        %v1529 = vshrl.u32 %v1528, 5
        %v1530 = vand.u32 %v1528, 31
        %v1531 = vsub.s32 32, %v1530
        %v1532 = vshrl.u32 683565275, %v1531
        %v1533 = vshll.u32 683565275, %v1530
        %v1534 = vshrl.u32 2475754826, %v1531
        %v1535 = vor.u32 %v1533, %v1534
        %v1536 = vshll.u32 2475754826, %v1530
        %v1537 = vshrl.u32 2131351028, %v1531
        %v1538 = vor.u32 %v1536, %v1537
        %v1539 = vshll.u32 2131351028, %v1530
        %v1540 = vshrl.u32 2102212464, %v1531
        %v1541 = vor.u32 %v1539, %v1540
        %v1542 = vshll.u32 2102212464, %v1530
        %v1543 = vshrl.u32 920167782, %v1531
        %v1544 = vor.u32 %v1542, %v1543
        %v1545 = vshll.u32 920167782, %v1530
        %v1546 = vshrl.u32 1326507024, %v1531
        %v1547 = vor.u32 %v1545, %v1546
        %vm1548 = vcmp.lt.s32.totalorder %v1529, 1
        %vm1549 = vcmp.lt.s32.totalorder %v1529, 2
        %vm1550 = vcmp.lt.s32.totalorder %v1529, 3
        %vm1551 = vcmp.lt.s32.totalorder %v1529, 4
        %v1552 = vsel %vm1548, %v1532, %v1535
        %v1553 = vsel %vm1551, %v1541, 2102212464
        %v1554 = vsel %vm1550, %v1538, %v1553
        %v1555 = vsel %vm1549, %v1552, %v1554
        %v1556 = vsel %vm1548, %v1535, %v1538
        %v1557 = vsel %vm1551, %v1544, 920167782
        %v1558 = vsel %vm1550, %v1541, %v1557
        %v1559 = vsel %vm1549, %v1556, %v1558
        %v1560 = vsel %vm1548, %v1538, %v1541
        %v1561 = vsel %vm1551, %v1547, 1326507024
        %v1562 = vsel %vm1550, %v1544, %v1561
        %v1563 = vsel %vm1549, %v1560, %v1562
        %v1564 = vshll.u32 %v1524, 8
        %v1565 = vmul.u32.u64.compose %v1564, %v1563
        %v1566 = vextract.low.u32 %v1565
        %v1567 = vextract.high.u32 %v1565
        %v1568 = vmul.u32.u64.compose %v1564, %v1559
        %v1569 = vextract.low.u32 %v1568
        %v1570 = vextract.high.u32 %v1568
        %v1571 = vmul.u32 %v1564, %v1555
        %v1572 = vadd.s32 %v1567, %v1569
        %vm1573 = vc.u32 %v1567, %v1569
        %v1574 = vadd.s32 %v1570, 1
        %v1575 = vsel %vm1573, %v1574, %v1570
        %v1576 = vadd.s32 %v1571, %v1575
        %v1577 = vadd.s32 %v1576, 536870912
        %v1578 = vshrl.u32 %v1577, 30
        %v1579 = vshll.u32 %v1578, 30
        %v1580 = vsub.s32 %v1576, %v1579
        %vm1581 = vcmp.lt.s32.totalorder %v1580, 0
        %v1582 = vsub.s32 0, %v1580
        %v1583 = vsel %vm1581, %v1582, %v1580
        %v1584 = vclz %v1583
        %v1585 = vsub.s32 %v1584, 2
        %vm1586 = vcmp.gt.s32.totalorder 0, %v1585
        %v1587 = vsel %vm1586, 0, %v1585
        %v1588 = vsub.s32 32, %v1587
        %v1589 = vshll.u32 %v1580, %v1587
        %v1590 = vshrl.u32 %v1572, %v1588
        %v1591 = vor.u32 %v1589, %v1590
        %v1592 = vsub.s32 4294967266, %v1587
        %v1593 = vadd.s32 %v1592, 127
        %v1594 = vshll.u32 %v1593, 23
        %v1595 = vor.u32 4788187, %v1594
        %v1596 = vand.u32 2147483647, %v1595
        %v1598 = vcvt.s32.f32 %v1591
        %v1599 = vmul.f32 %v1598, %v1596
        %v1600 = vxor.u32 %v1599, 2147483648
        %v1601 = vsel %vm1518, %v1600, %v1599
        %v1602 = vsub.s32 4, %v1578
        %v1603 = vsel %vm1518, %v1602, %v1578
        %v1604 = vsel %vm1517, %v267, %v1601
        %v1605 = vsel %vm1517, 0, %v1603
        %v1606 = vcosq.f32.pop %v1604
        %v1607 = vsinq.f32.pop %v1604
        %vm1608 = vweird.f32 %v267
        %v1609 = vadd.s32 %v1605, 3
        %v1610 = vand.u32 %v1609, 3
        %vm1611 = vcmp.lt.s32.totalorder %v1610, 2
        %vm1612 = vcmp.eq.s32.totalorder %v1610, 0
        %v1613 = vxor.u32 %v1607, 2147483648
        %v1614 = vsel %vm1612, %v1606, %v1613
        %vm1615 = vcmp.eq.s32.totalorder %v1610, 2
        %v1616 = vxor.u32 %v1606, 2147483648
        %v1617 = vsel %vm1615, %v1616, %v1607
        %v1618 = vsel %vm1611, %v1614, %v1617
        %v1619 = vsel %vm1608, nan, %v1618
        %v1620 = vand.u32 2147483647, %v255
        %vm1621 = vcmp.le.f32.partialorder %v1620, 0.7853982
        %vm1622 = vcmp.lt.s32.totalorder %v255, 0
        %v1623 = vand.u32 %v255, 2139095040
        %v1624 = vshrl.u32 %v1623, 23
        %v1625 = vsub.s32 %v1624, 127
        %v1626 = vand.u32 2147483647, %v255
        %v1627 = vand.u32 %v1626, 8388607
        %v1628 = vor.u32 %v1627, 8388608
        %v1629 = vsub.s32 0, %v1628
        %v1630 = vadd.s32 %v1625, 1
        %vm1631 = vcmp.gt.s32.totalorder %v1630, 0
        %v1632 = vsel %vm1631, %v1630, 0
        %v1633 = vshrl.u32 %v1632, 5
        %v1634 = vand.u32 %v1632, 31
        %v1635 = vsub.s32 32, %v1634
        %v1636 = vshrl.u32 683565275, %v1635
        %v1637 = vshll.u32 683565275, %v1634
        %v1638 = vshrl.u32 2475754826, %v1635
        %v1639 = vor.u32 %v1637, %v1638
        %v1640 = vshll.u32 2475754826, %v1634
        %v1641 = vshrl.u32 2131351028, %v1635
        %v1642 = vor.u32 %v1640, %v1641
        %v1643 = vshll.u32 2131351028, %v1634
        %v1644 = vshrl.u32 2102212464, %v1635
        %v1645 = vor.u32 %v1643, %v1644
        %v1646 = vshll.u32 2102212464, %v1634
        %v1647 = vshrl.u32 920167782, %v1635
        %v1648 = vor.u32 %v1646, %v1647
        %v1649 = vshll.u32 920167782, %v1634
        %v1650 = vshrl.u32 1326507024, %v1635
        %v1651 = vor.u32 %v1649, %v1650
        %vm1652 = vcmp.lt.s32.totalorder %v1633, 1
        %vm1653 = vcmp.lt.s32.totalorder %v1633, 2
        %vm1654 = vcmp.lt.s32.totalorder %v1633, 3
        %vm1655 = vcmp.lt.s32.totalorder %v1633, 4
        %v1656 = vsel %vm1652, %v1636, %v1639
        %v1657 = vsel %vm1655, %v1645, 2102212464
        %v1658 = vsel %vm1654, %v1642, %v1657
        %v1659 = vsel %vm1653, %v1656, %v1658
        %v1660 = vsel %vm1652, %v1639, %v1642
        %v1661 = vsel %vm1655, %v1648, 920167782
        %v1662 = vsel %vm1654, %v1645, %v1661
        %v1663 = vsel %vm1653, %v1660, %v1662
        %v1664 = vsel %vm1652, %v1642, %v1645
        %v1665 = vsel %vm1655, %v1651, 1326507024
        %v1666 = vsel %vm1654, %v1648, %v1665
        %v1667 = vsel %vm1653, %v1664, %v1666
        %v1668 = vshll.u32 %v1628, 8
        %v1669 = vmul.u32.u64.compose %v1668, %v1667
        %v1670 = vextract.low.u32 %v1669
        %v1671 = vextract.high.u32 %v1669
        %v1672 = vmul.u32.u64.compose %v1668, %v1663
        %v1673 = vextract.low.u32 %v1672
        %v1674 = vextract.high.u32 %v1672
        %v1675 = vmul.u32 %v1668, %v1659
        %v1676 = vadd.s32 %v1671, %v1673
        %vm1677 = vc.u32 %v1671, %v1673
        %v1678 = vadd.s32 %v1674, 1
        %v1679 = vsel %vm1677, %v1678, %v1674
        %v1680 = vadd.s32 %v1675, %v1679
        %v1681 = vadd.s32 %v1680, 536870912
        %v1682 = vshrl.u32 %v1681, 30
        %v1683 = vshll.u32 %v1682, 30
        %v1684 = vsub.s32 %v1680, %v1683
        %vm1685 = vcmp.lt.s32.totalorder %v1684, 0
        %v1686 = vsub.s32 0, %v1684
        %v1687 = vsel %vm1685, %v1686, %v1684
        %v1688 = vclz %v1687
        %v1689 = vsub.s32 %v1688, 2
        %vm1690 = vcmp.gt.s32.totalorder 0, %v1689
        %v1691 = vsel %vm1690, 0, %v1689
        %v1692 = vsub.s32 32, %v1691
        %v1693 = vshll.u32 %v1684, %v1691
        %v1694 = vshrl.u32 %v1676, %v1692
        %v1695 = vor.u32 %v1693, %v1694
        %v1696 = vsub.s32 4294967266, %v1691
        %v1697 = vadd.s32 %v1696, 127
        %v1698 = vshll.u32 %v1697, 23
        %v1699 = vor.u32 4788187, %v1698
        %v1700 = vand.u32 2147483647, %v1699
        %v1702 = vcvt.s32.f32 %v1695
        %v1703 = vmul.f32 %v1702, %v1700
        %v1704 = vxor.u32 %v1703, 2147483648
        %v1705 = vsel %vm1622, %v1704, %v1703
        %v1706 = vsub.s32 4, %v1682
        %v1707 = vsel %vm1622, %v1706, %v1682
        %v1708 = vsel %vm1621, %v255, %v1705
        %v1709 = vsel %vm1621, 0, %v1707
        %v1710 = vcosq.f32.pop %v1708
        %v1711 = vsinq.f32.pop %v1708
        %vm1712 = vweird.f32 %v255
        %v1713 = vand.u32 %v1709, 3
        %vm1714 = vcmp.lt.s32.totalorder %v1713, 2
        %vm1715 = vcmp.eq.s32.totalorder %v1713, 0
        %v1716 = vxor.u32 %v1711, 2147483648
        %v1717 = vsel %vm1715, %v1710, %v1716
        %vm1718 = vcmp.eq.s32.totalorder %v1713, 2
        %v1719 = vxor.u32 %v1710, 2147483648
        %v1720 = vsel %vm1718, %v1719, %v1711
        %v1721 = vsel %vm1714, %v1717, %v1720
        %v1722 = vsel %vm1712, nan, %v1721
        %v1723 = vand.u32 2147483647, %v256
        %vm1724 = vcmp.le.f32.partialorder %v1723, 0.7853982
        %vm1725 = vcmp.lt.s32.totalorder %v256, 0
        %v1726 = vand.u32 %v256, 2139095040
        %v1727 = vshrl.u32 %v1726, 23
        %v1728 = vsub.s32 %v1727, 127
        %v1729 = vand.u32 2147483647, %v256
        %v1730 = vand.u32 %v1729, 8388607
        %v1731 = vor.u32 %v1730, 8388608
        %v1732 = vsub.s32 0, %v1731
        %v1733 = vadd.s32 %v1728, 1
        %vm1734 = vcmp.gt.s32.totalorder %v1733, 0
        %v1735 = vsel %vm1734, %v1733, 0
        %v1736 = vshrl.u32 %v1735, 5
        %v1737 = vand.u32 %v1735, 31
        %v1738 = vsub.s32 32, %v1737
        %v1739 = vshrl.u32 683565275, %v1738
        %v1740 = vshll.u32 683565275, %v1737
        %v1741 = vshrl.u32 2475754826, %v1738
        %v1742 = vor.u32 %v1740, %v1741
        %v1743 = vshll.u32 2475754826, %v1737
        %v1744 = vshrl.u32 2131351028, %v1738
        %v1745 = vor.u32 %v1743, %v1744
        %v1746 = vshll.u32 2131351028, %v1737
        %v1747 = vshrl.u32 2102212464, %v1738
        %v1748 = vor.u32 %v1746, %v1747
        %v1749 = vshll.u32 2102212464, %v1737
        %v1750 = vshrl.u32 920167782, %v1738
        %v1751 = vor.u32 %v1749, %v1750
        %v1752 = vshll.u32 920167782, %v1737
        %v1753 = vshrl.u32 1326507024, %v1738
        %v1754 = vor.u32 %v1752, %v1753
        %vm1755 = vcmp.lt.s32.totalorder %v1736, 1
        %vm1756 = vcmp.lt.s32.totalorder %v1736, 2
        %vm1757 = vcmp.lt.s32.totalorder %v1736, 3
        %vm1758 = vcmp.lt.s32.totalorder %v1736, 4
        %v1759 = vsel %vm1755, %v1739, %v1742
        %v1760 = vsel %vm1758, %v1748, 2102212464
        %v1761 = vsel %vm1757, %v1745, %v1760
        %v1762 = vsel %vm1756, %v1759, %v1761
        %v1763 = vsel %vm1755, %v1742, %v1745
        %v1764 = vsel %vm1758, %v1751, 920167782
        %v1765 = vsel %vm1757, %v1748, %v1764
        %v1766 = vsel %vm1756, %v1763, %v1765
        %v1767 = vsel %vm1755, %v1745, %v1748
        %v1768 = vsel %vm1758, %v1754, 1326507024
        %v1769 = vsel %vm1757, %v1751, %v1768
        %v1770 = vsel %vm1756, %v1767, %v1769
        %v1771 = vshll.u32 %v1731, 8
        %v1772 = vmul.u32.u64.compose %v1771, %v1770
        %v1773 = vextract.low.u32 %v1772
        %v1774 = vextract.high.u32 %v1772
        %v1775 = vmul.u32.u64.compose %v1771, %v1766
        %v1776 = vextract.low.u32 %v1775
        %v1777 = vextract.high.u32 %v1775
        %v1778 = vmul.u32 %v1771, %v1762
        %v1779 = vadd.s32 %v1774, %v1776
        %vm1780 = vc.u32 %v1774, %v1776
        %v1781 = vadd.s32 %v1777, 1
        %v1782 = vsel %vm1780, %v1781, %v1777
        %v1783 = vadd.s32 %v1778, %v1782
        %v1784 = vadd.s32 %v1783, 536870912
        %v1785 = vshrl.u32 %v1784, 30
        %v1786 = vshll.u32 %v1785, 30
        %v1787 = vsub.s32 %v1783, %v1786
        %vm1788 = vcmp.lt.s32.totalorder %v1787, 0
        %v1789 = vsub.s32 0, %v1787
        %v1790 = vsel %vm1788, %v1789, %v1787
        %v1791 = vclz %v1790
        %v1792 = vsub.s32 %v1791, 2
        %vm1793 = vcmp.gt.s32.totalorder 0, %v1792
        %v1794 = vsel %vm1793, 0, %v1792
        %v1795 = vsub.s32 32, %v1794
        %v1796 = vshll.u32 %v1787, %v1794
        %v1797 = vshrl.u32 %v1779, %v1795
        %v1798 = vor.u32 %v1796, %v1797
        %v1799 = vsub.s32 4294967266, %v1794
        %v1800 = vadd.s32 %v1799, 127
        %v1801 = vshll.u32 %v1800, 23
        %v1802 = vor.u32 4788187, %v1801
        %v1803 = vand.u32 2147483647, %v1802
        %v1805 = vcvt.s32.f32 %v1798
        %v1806 = vmul.f32 %v1805, %v1803
        %v1807 = vxor.u32 %v1806, 2147483648
        %v1808 = vsel %vm1725, %v1807, %v1806
        %v1809 = vsub.s32 4, %v1785
        %v1810 = vsel %vm1725, %v1809, %v1785
        %v1811 = vsel %vm1724, %v256, %v1808
        %v1812 = vsel %vm1724, 0, %v1810
        %v1813 = vcosq.f32.pop %v1811
        %v1814 = vsinq.f32.pop %v1811
        %vm1815 = vweird.f32 %v256
        %v1816 = vand.u32 %v1812, 3
        %vm1817 = vcmp.lt.s32.totalorder %v1816, 2
        %vm1818 = vcmp.eq.s32.totalorder %v1816, 0
        %v1819 = vxor.u32 %v1814, 2147483648
        %v1820 = vsel %vm1818, %v1813, %v1819
        %vm1821 = vcmp.eq.s32.totalorder %v1816, 2
        %v1822 = vxor.u32 %v1813, 2147483648
        %v1823 = vsel %vm1821, %v1822, %v1814
        %v1824 = vsel %vm1817, %v1820, %v1823
        %v1825 = vsel %vm1815, nan, %v1824
        %v1826 = vand.u32 2147483647, %v257
        %vm1827 = vcmp.le.f32.partialorder %v1826, 0.7853982
        %vm1828 = vcmp.lt.s32.totalorder %v257, 0
        %v1829 = vand.u32 %v257, 2139095040
        %v1830 = vshrl.u32 %v1829, 23
        %v1831 = vsub.s32 %v1830, 127
        %v1832 = vand.u32 2147483647, %v257
        %v1833 = vand.u32 %v1832, 8388607
        %v1834 = vor.u32 %v1833, 8388608
        %v1835 = vsub.s32 0, %v1834
        %v1836 = vadd.s32 %v1831, 1
        %vm1837 = vcmp.gt.s32.totalorder %v1836, 0
        %v1838 = vsel %vm1837, %v1836, 0
        %v1839 = vshrl.u32 %v1838, 5
        %v1840 = vand.u32 %v1838, 31
        %v1841 = vsub.s32 32, %v1840
        %v1842 = vshrl.u32 683565275, %v1841
        %v1843 = vshll.u32 683565275, %v1840
        %v1844 = vshrl.u32 2475754826, %v1841
        %v1845 = vor.u32 %v1843, %v1844
        %v1846 = vshll.u32 2475754826, %v1840
        %v1847 = vshrl.u32 2131351028, %v1841
        %v1848 = vor.u32 %v1846, %v1847
        %v1849 = vshll.u32 2131351028, %v1840
        %v1850 = vshrl.u32 2102212464, %v1841
        %v1851 = vor.u32 %v1849, %v1850
        %v1852 = vshll.u32 2102212464, %v1840
        %v1853 = vshrl.u32 920167782, %v1841
        %v1854 = vor.u32 %v1852, %v1853
        %v1855 = vshll.u32 920167782, %v1840
        %v1856 = vshrl.u32 1326507024, %v1841
        %v1857 = vor.u32 %v1855, %v1856
        %vm1858 = vcmp.lt.s32.totalorder %v1839, 1
        %vm1859 = vcmp.lt.s32.totalorder %v1839, 2
        %vm1860 = vcmp.lt.s32.totalorder %v1839, 3
        %vm1861 = vcmp.lt.s32.totalorder %v1839, 4
        %v1862 = vsel %vm1858, %v1842, %v1845
        %v1863 = vsel %vm1861, %v1851, 2102212464
        %v1864 = vsel %vm1860, %v1848, %v1863
        %v1865 = vsel %vm1859, %v1862, %v1864
        %v1866 = vsel %vm1858, %v1845, %v1848
        %v1867 = vsel %vm1861, %v1854, 920167782
        %v1868 = vsel %vm1860, %v1851, %v1867
        %v1869 = vsel %vm1859, %v1866, %v1868
        %v1870 = vsel %vm1858, %v1848, %v1851
        %v1871 = vsel %vm1861, %v1857, 1326507024
        %v1872 = vsel %vm1860, %v1854, %v1871
        %v1873 = vsel %vm1859, %v1870, %v1872
        %v1874 = vshll.u32 %v1834, 8
        %v1875 = vmul.u32.u64.compose %v1874, %v1873
        %v1876 = vextract.low.u32 %v1875
        %v1877 = vextract.high.u32 %v1875
        %v1878 = vmul.u32.u64.compose %v1874, %v1869
        %v1879 = vextract.low.u32 %v1878
        %v1880 = vextract.high.u32 %v1878
        %v1881 = vmul.u32 %v1874, %v1865
        %v1882 = vadd.s32 %v1877, %v1879
        %vm1883 = vc.u32 %v1877, %v1879
        %v1884 = vadd.s32 %v1880, 1
        %v1885 = vsel %vm1883, %v1884, %v1880
        %v1886 = vadd.s32 %v1881, %v1885
        %v1887 = vadd.s32 %v1886, 536870912
        %v1888 = vshrl.u32 %v1887, 30
        %v1889 = vshll.u32 %v1888, 30
        %v1890 = vsub.s32 %v1886, %v1889
        %vm1891 = vcmp.lt.s32.totalorder %v1890, 0
        %v1892 = vsub.s32 0, %v1890
        %v1893 = vsel %vm1891, %v1892, %v1890
        %v1894 = vclz %v1893
        %v1895 = vsub.s32 %v1894, 2
        %vm1896 = vcmp.gt.s32.totalorder 0, %v1895
        %v1897 = vsel %vm1896, 0, %v1895
        %v1898 = vsub.s32 32, %v1897
        %v1899 = vshll.u32 %v1890, %v1897
        %v1900 = vshrl.u32 %v1882, %v1898
        %v1901 = vor.u32 %v1899, %v1900
        %v1902 = vsub.s32 4294967266, %v1897
        %v1903 = vadd.s32 %v1902, 127
        %v1904 = vshll.u32 %v1903, 23
        %v1905 = vor.u32 4788187, %v1904
        %v1906 = vand.u32 2147483647, %v1905
        %v1908 = vcvt.s32.f32 %v1901
        %v1909 = vmul.f32 %v1908, %v1906
        %v1910 = vxor.u32 %v1909, 2147483648
        %v1911 = vsel %vm1828, %v1910, %v1909
        %v1912 = vsub.s32 4, %v1888
        %v1913 = vsel %vm1828, %v1912, %v1888
        %v1914 = vsel %vm1827, %v257, %v1911
        %v1915 = vsel %vm1827, 0, %v1913
        %v1916 = vcosq.f32.pop %v1914
        %v1917 = vsinq.f32.pop %v1914
        %vm1918 = vweird.f32 %v257
        %v1919 = vand.u32 %v1915, 3
        %vm1920 = vcmp.lt.s32.totalorder %v1919, 2
        %vm1921 = vcmp.eq.s32.totalorder %v1919, 0
        %v1922 = vxor.u32 %v1917, 2147483648
        %v1923 = vsel %vm1921, %v1916, %v1922
        %vm1924 = vcmp.eq.s32.totalorder %v1919, 2
        %v1925 = vxor.u32 %v1916, 2147483648
        %v1926 = vsel %vm1924, %v1925, %v1917
        %v1927 = vsel %vm1920, %v1923, %v1926
        %v1928 = vsel %vm1918, nan, %v1927
        %v1929 = vand.u32 2147483647, %v258
        %vm1930 = vcmp.le.f32.partialorder %v1929, 0.7853982
        %vm1931 = vcmp.lt.s32.totalorder %v258, 0
        %v1932 = vand.u32 %v258, 2139095040
        %v1933 = vshrl.u32 %v1932, 23
        %v1934 = vsub.s32 %v1933, 127
        %v1935 = vand.u32 2147483647, %v258
        %v1936 = vand.u32 %v1935, 8388607
        %v1937 = vor.u32 %v1936, 8388608
        %v1938 = vsub.s32 0, %v1937
        %v1939 = vadd.s32 %v1934, 1
        %vm1940 = vcmp.gt.s32.totalorder %v1939, 0
        %v1941 = vsel %vm1940, %v1939, 0
        %v1942 = vshrl.u32 %v1941, 5
        %v1943 = vand.u32 %v1941, 31
        %v1944 = vsub.s32 32, %v1943
        %v1945 = vshrl.u32 683565275, %v1944
        %v1946 = vshll.u32 683565275, %v1943
        %v1947 = vshrl.u32 2475754826, %v1944
        %v1948 = vor.u32 %v1946, %v1947
        %v1949 = vshll.u32 2475754826, %v1943
        %v1950 = vshrl.u32 2131351028, %v1944
        %v1951 = vor.u32 %v1949, %v1950
        %v1952 = vshll.u32 2131351028, %v1943
        %v1953 = vshrl.u32 2102212464, %v1944
        %v1954 = vor.u32 %v1952, %v1953
        %v1955 = vshll.u32 2102212464, %v1943
        %v1956 = vshrl.u32 920167782, %v1944
        %v1957 = vor.u32 %v1955, %v1956
        %v1958 = vshll.u32 920167782, %v1943
        %v1959 = vshrl.u32 1326507024, %v1944
        %v1960 = vor.u32 %v1958, %v1959
        %vm1961 = vcmp.lt.s32.totalorder %v1942, 1
        %vm1962 = vcmp.lt.s32.totalorder %v1942, 2
        %vm1963 = vcmp.lt.s32.totalorder %v1942, 3
        %vm1964 = vcmp.lt.s32.totalorder %v1942, 4
        %v1965 = vsel %vm1961, %v1945, %v1948
        %v1966 = vsel %vm1964, %v1954, 2102212464
        %v1967 = vsel %vm1963, %v1951, %v1966
        %v1968 = vsel %vm1962, %v1965, %v1967
        %v1969 = vsel %vm1961, %v1948, %v1951
        %v1970 = vsel %vm1964, %v1957, 920167782
        %v1971 = vsel %vm1963, %v1954, %v1970
        %v1972 = vsel %vm1962, %v1969, %v1971
        %v1973 = vsel %vm1961, %v1951, %v1954
        %v1974 = vsel %vm1964, %v1960, 1326507024
        %v1975 = vsel %vm1963, %v1957, %v1974
        %v1976 = vsel %vm1962, %v1973, %v1975
        %v1977 = vshll.u32 %v1937, 8
        %v1978 = vmul.u32.u64.compose %v1977, %v1976
        %v1979 = vextract.low.u32 %v1978
        %v1980 = vextract.high.u32 %v1978
        %v1981 = vmul.u32.u64.compose %v1977, %v1972
        %v1982 = vextract.low.u32 %v1981
        %v1983 = vextract.high.u32 %v1981
        %v1984 = vmul.u32 %v1977, %v1968
        %v1985 = vadd.s32 %v1980, %v1982
        %vm1986 = vc.u32 %v1980, %v1982
        %v1987 = vadd.s32 %v1983, 1
        %v1988 = vsel %vm1986, %v1987, %v1983
        %v1989 = vadd.s32 %v1984, %v1988
        %v1990 = vadd.s32 %v1989, 536870912
        %v1991 = vshrl.u32 %v1990, 30
        %v1992 = vshll.u32 %v1991, 30
        %v1993 = vsub.s32 %v1989, %v1992
        %vm1994 = vcmp.lt.s32.totalorder %v1993, 0
        %v1995 = vsub.s32 0, %v1993
        %v1996 = vsel %vm1994, %v1995, %v1993
        %v1997 = vclz %v1996
        %v1998 = vsub.s32 %v1997, 2
        %vm1999 = vcmp.gt.s32.totalorder 0, %v1998
        %v2000 = vsel %vm1999, 0, %v1998
        %v2001 = vsub.s32 32, %v2000
        %v2002 = vshll.u32 %v1993, %v2000
        %v2003 = vshrl.u32 %v1985, %v2001
        %v2004 = vor.u32 %v2002, %v2003
        %v2005 = vsub.s32 4294967266, %v2000
        %v2006 = vadd.s32 %v2005, 127
        %v2007 = vshll.u32 %v2006, 23
        %v2008 = vor.u32 4788187, %v2007
        %v2009 = vand.u32 2147483647, %v2008
        %v2011 = vcvt.s32.f32 %v2004
        %v2012 = vmul.f32 %v2011, %v2009
        %v2013 = vxor.u32 %v2012, 2147483648
        %v2014 = vsel %vm1931, %v2013, %v2012
        %v2015 = vsub.s32 4, %v1991
        %v2016 = vsel %vm1931, %v2015, %v1991
        %v2017 = vsel %vm1930, %v258, %v2014
        %v2018 = vsel %vm1930, 0, %v2016
        %v2019 = vcosq.f32.pop %v2017
        %v2020 = vsinq.f32.pop %v2017
        %vm2021 = vweird.f32 %v258
        %v2022 = vand.u32 %v2018, 3
        %vm2023 = vcmp.lt.s32.totalorder %v2022, 2
        %vm2024 = vcmp.eq.s32.totalorder %v2022, 0
        %v2025 = vxor.u32 %v2020, 2147483648
        %v2026 = vsel %vm2024, %v2019, %v2025
        %vm2027 = vcmp.eq.s32.totalorder %v2022, 2
        %v2028 = vxor.u32 %v2019, 2147483648
        %v2029 = vsel %vm2027, %v2028, %v2020
        %v2030 = vsel %vm2023, %v2026, %v2029
        %v2031 = vsel %vm2021, nan, %v2030
        %v2032 = vand.u32 2147483647, %v259
        %vm2033 = vcmp.le.f32.partialorder %v2032, 0.7853982
        %vm2034 = vcmp.lt.s32.totalorder %v259, 0
        %v2035 = vand.u32 %v259, 2139095040
        %v2036 = vshrl.u32 %v2035, 23
        %v2037 = vsub.s32 %v2036, 127
        %v2038 = vand.u32 2147483647, %v259
        %v2039 = vand.u32 %v2038, 8388607
        %v2040 = vor.u32 %v2039, 8388608
        %v2041 = vsub.s32 0, %v2040
        %v2042 = vadd.s32 %v2037, 1
        %vm2043 = vcmp.gt.s32.totalorder %v2042, 0
        %v2044 = vsel %vm2043, %v2042, 0
        %v2045 = vshrl.u32 %v2044, 5
        %v2046 = vand.u32 %v2044, 31
        %v2047 = vsub.s32 32, %v2046
        %v2048 = vshrl.u32 683565275, %v2047
        %v2049 = vshll.u32 683565275, %v2046
        %v2050 = vshrl.u32 2475754826, %v2047
        %v2051 = vor.u32 %v2049, %v2050
        %v2052 = vshll.u32 2475754826, %v2046
        %v2053 = vshrl.u32 2131351028, %v2047
        %v2054 = vor.u32 %v2052, %v2053
        %v2055 = vshll.u32 2131351028, %v2046
        %v2056 = vshrl.u32 2102212464, %v2047
        %v2057 = vor.u32 %v2055, %v2056
        %v2058 = vshll.u32 2102212464, %v2046
        %v2059 = vshrl.u32 920167782, %v2047
        %v2060 = vor.u32 %v2058, %v2059
        %v2061 = vshll.u32 920167782, %v2046
        %v2062 = vshrl.u32 1326507024, %v2047
        %v2063 = vor.u32 %v2061, %v2062
        %vm2064 = vcmp.lt.s32.totalorder %v2045, 1
        %vm2065 = vcmp.lt.s32.totalorder %v2045, 2
        %vm2066 = vcmp.lt.s32.totalorder %v2045, 3
        %vm2067 = vcmp.lt.s32.totalorder %v2045, 4
        %v2068 = vsel %vm2064, %v2048, %v2051
        %v2069 = vsel %vm2067, %v2057, 2102212464
        %v2070 = vsel %vm2066, %v2054, %v2069
        %v2071 = vsel %vm2065, %v2068, %v2070
        %v2072 = vsel %vm2064, %v2051, %v2054
        %v2073 = vsel %vm2067, %v2060, 920167782
        %v2074 = vsel %vm2066, %v2057, %v2073
        %v2075 = vsel %vm2065, %v2072, %v2074
        %v2076 = vsel %vm2064, %v2054, %v2057
        %v2077 = vsel %vm2067, %v2063, 1326507024
        %v2078 = vsel %vm2066, %v2060, %v2077
        %v2079 = vsel %vm2065, %v2076, %v2078
        %v2080 = vshll.u32 %v2040, 8
        %v2081 = vmul.u32.u64.compose %v2080, %v2079
        %v2082 = vextract.low.u32 %v2081
        %v2083 = vextract.high.u32 %v2081
        %v2084 = vmul.u32.u64.compose %v2080, %v2075
        %v2085 = vextract.low.u32 %v2084
        %v2086 = vextract.high.u32 %v2084
        %v2087 = vmul.u32 %v2080, %v2071
        %v2088 = vadd.s32 %v2083, %v2085
        %vm2089 = vc.u32 %v2083, %v2085
        %v2090 = vadd.s32 %v2086, 1
        %v2091 = vsel %vm2089, %v2090, %v2086
        %v2092 = vadd.s32 %v2087, %v2091
        %v2093 = vadd.s32 %v2092, 536870912
        %v2094 = vshrl.u32 %v2093, 30
        %v2095 = vshll.u32 %v2094, 30
        %v2096 = vsub.s32 %v2092, %v2095
        %vm2097 = vcmp.lt.s32.totalorder %v2096, 0
        %v2098 = vsub.s32 0, %v2096
        %v2099 = vsel %vm2097, %v2098, %v2096
        %v2100 = vclz %v2099
        %v2101 = vsub.s32 %v2100, 2
        %vm2102 = vcmp.gt.s32.totalorder 0, %v2101
        %v2103 = vsel %vm2102, 0, %v2101
        %v2104 = vsub.s32 32, %v2103
        %v2105 = vshll.u32 %v2096, %v2103
        %v2106 = vshrl.u32 %v2088, %v2104
        %v2107 = vor.u32 %v2105, %v2106
        %v2108 = vsub.s32 4294967266, %v2103
        %v2109 = vadd.s32 %v2108, 127
        %v2110 = vshll.u32 %v2109, 23
        %v2111 = vor.u32 4788187, %v2110
        %v2112 = vand.u32 2147483647, %v2111
        %v2114 = vcvt.s32.f32 %v2107
        %v2115 = vmul.f32 %v2114, %v2112
        %v2116 = vxor.u32 %v2115, 2147483648
        %v2117 = vsel %vm2034, %v2116, %v2115
        %v2118 = vsub.s32 4, %v2094
        %v2119 = vsel %vm2034, %v2118, %v2094
        %v2120 = vsel %vm2033, %v259, %v2117
        %v2121 = vsel %vm2033, 0, %v2119
        %v2122 = vcosq.f32.pop %v2120
        %v2123 = vsinq.f32.pop %v2120
        %vm2124 = vweird.f32 %v259
        %v2125 = vand.u32 %v2121, 3
        %vm2126 = vcmp.lt.s32.totalorder %v2125, 2
        %vm2127 = vcmp.eq.s32.totalorder %v2125, 0
        %v2128 = vxor.u32 %v2123, 2147483648
        %v2129 = vsel %vm2127, %v2122, %v2128
        %vm2130 = vcmp.eq.s32.totalorder %v2125, 2
        %v2131 = vxor.u32 %v2122, 2147483648
        %v2132 = vsel %vm2130, %v2131, %v2123
        %v2133 = vsel %vm2126, %v2129, %v2132
        %v2134 = vsel %vm2124, nan, %v2133
        %v2135 = vand.u32 2147483647, %v260
        %vm2136 = vcmp.le.f32.partialorder %v2135, 0.7853982
        %vm2137 = vcmp.lt.s32.totalorder %v260, 0
        %v2138 = vand.u32 %v260, 2139095040
        %v2139 = vshrl.u32 %v2138, 23
        %v2140 = vsub.s32 %v2139, 127
        %v2141 = vand.u32 2147483647, %v260
        %v2142 = vand.u32 %v2141, 8388607
        %v2143 = vor.u32 %v2142, 8388608
        %v2144 = vsub.s32 0, %v2143
        %v2145 = vadd.s32 %v2140, 1
        %vm2146 = vcmp.gt.s32.totalorder %v2145, 0
        %v2147 = vsel %vm2146, %v2145, 0
        %v2148 = vshrl.u32 %v2147, 5
        %v2149 = vand.u32 %v2147, 31
        %v2150 = vsub.s32 32, %v2149
        %v2151 = vshrl.u32 683565275, %v2150
        %v2152 = vshll.u32 683565275, %v2149
        %v2153 = vshrl.u32 2475754826, %v2150
        %v2154 = vor.u32 %v2152, %v2153
        %v2155 = vshll.u32 2475754826, %v2149
        %v2156 = vshrl.u32 2131351028, %v2150
        %v2157 = vor.u32 %v2155, %v2156
        %v2158 = vshll.u32 2131351028, %v2149
        %v2159 = vshrl.u32 2102212464, %v2150
        %v2160 = vor.u32 %v2158, %v2159
        %v2161 = vshll.u32 2102212464, %v2149
        %v2162 = vshrl.u32 920167782, %v2150
        %v2163 = vor.u32 %v2161, %v2162
        %v2164 = vshll.u32 920167782, %v2149
        %v2165 = vshrl.u32 1326507024, %v2150
        %v2166 = vor.u32 %v2164, %v2165
        %vm2167 = vcmp.lt.s32.totalorder %v2148, 1
        %vm2168 = vcmp.lt.s32.totalorder %v2148, 2
        %vm2169 = vcmp.lt.s32.totalorder %v2148, 3
        %vm2170 = vcmp.lt.s32.totalorder %v2148, 4
        %v2171 = vsel %vm2167, %v2151, %v2154
        %v2172 = vsel %vm2170, %v2160, 2102212464
        %v2173 = vsel %vm2169, %v2157, %v2172
        %v2174 = vsel %vm2168, %v2171, %v2173
        %v2175 = vsel %vm2167, %v2154, %v2157
        %v2176 = vsel %vm2170, %v2163, 920167782
        %v2177 = vsel %vm2169, %v2160, %v2176
        %v2178 = vsel %vm2168, %v2175, %v2177
        %v2179 = vsel %vm2167, %v2157, %v2160
        %v2180 = vsel %vm2170, %v2166, 1326507024
        %v2181 = vsel %vm2169, %v2163, %v2180
        %v2182 = vsel %vm2168, %v2179, %v2181
        %v2183 = vshll.u32 %v2143, 8
        %v2184 = vmul.u32.u64.compose %v2183, %v2182
        %v2185 = vextract.low.u32 %v2184
        %v2186 = vextract.high.u32 %v2184
        %v2187 = vmul.u32.u64.compose %v2183, %v2178
        %v2188 = vextract.low.u32 %v2187
        %v2189 = vextract.high.u32 %v2187
        %v2190 = vmul.u32 %v2183, %v2174
        %v2191 = vadd.s32 %v2186, %v2188
        %vm2192 = vc.u32 %v2186, %v2188
        %v2193 = vadd.s32 %v2189, 1
        %v2194 = vsel %vm2192, %v2193, %v2189
        %v2195 = vadd.s32 %v2190, %v2194
        %v2196 = vadd.s32 %v2195, 536870912
        %v2197 = vshrl.u32 %v2196, 30
        %v2198 = vshll.u32 %v2197, 30
        %v2199 = vsub.s32 %v2195, %v2198
        %vm2200 = vcmp.lt.s32.totalorder %v2199, 0
        %v2201 = vsub.s32 0, %v2199
        %v2202 = vsel %vm2200, %v2201, %v2199
        %v2203 = vclz %v2202
        %v2204 = vsub.s32 %v2203, 2
        %vm2205 = vcmp.gt.s32.totalorder 0, %v2204
        %v2206 = vsel %vm2205, 0, %v2204
        %v2207 = vsub.s32 32, %v2206
        %v2208 = vshll.u32 %v2199, %v2206
        %v2209 = vshrl.u32 %v2191, %v2207
        %v2210 = vor.u32 %v2208, %v2209
        %v2211 = vsub.s32 4294967266, %v2206
        %v2212 = vadd.s32 %v2211, 127
        %v2213 = vshll.u32 %v2212, 23
        %v2214 = vor.u32 4788187, %v2213
        %v2215 = vand.u32 2147483647, %v2214
        %v2217 = vcvt.s32.f32 %v2210
        %v2218 = vmul.f32 %v2217, %v2215
        %v2219 = vxor.u32 %v2218, 2147483648
        %v2220 = vsel %vm2137, %v2219, %v2218
        %v2221 = vsub.s32 4, %v2197
        %v2222 = vsel %vm2137, %v2221, %v2197
        %v2223 = vsel %vm2136, %v260, %v2220
        %v2224 = vsel %vm2136, 0, %v2222
        %v2225 = vcosq.f32.pop %v2223
        %v2226 = vsinq.f32.pop %v2223
        %vm2227 = vweird.f32 %v260
        %v2228 = vand.u32 %v2224, 3
        %vm2229 = vcmp.lt.s32.totalorder %v2228, 2
        %vm2230 = vcmp.eq.s32.totalorder %v2228, 0
        %v2231 = vxor.u32 %v2226, 2147483648
        %v2232 = vsel %vm2230, %v2225, %v2231
        %vm2233 = vcmp.eq.s32.totalorder %v2228, 2
        %v2234 = vxor.u32 %v2225, 2147483648
        %v2235 = vsel %vm2233, %v2234, %v2226
        %v2236 = vsel %vm2229, %v2232, %v2235
        %v2237 = vsel %vm2227, nan, %v2236
        %v2238 = vand.u32 2147483647, %v261
        %vm2239 = vcmp.le.f32.partialorder %v2238, 0.7853982
        %vm2240 = vcmp.lt.s32.totalorder %v261, 0
        %v2241 = vand.u32 %v261, 2139095040
        %v2242 = vshrl.u32 %v2241, 23
        %v2243 = vsub.s32 %v2242, 127
        %v2244 = vand.u32 2147483647, %v261
        %v2245 = vand.u32 %v2244, 8388607
        %v2246 = vor.u32 %v2245, 8388608
        %v2247 = vsub.s32 0, %v2246
        %v2248 = vadd.s32 %v2243, 1
        %vm2249 = vcmp.gt.s32.totalorder %v2248, 0
        %v2250 = vsel %vm2249, %v2248, 0
        %v2251 = vshrl.u32 %v2250, 5
        %v2252 = vand.u32 %v2250, 31
        %v2253 = vsub.s32 32, %v2252
        %v2254 = vshrl.u32 683565275, %v2253
        %v2255 = vshll.u32 683565275, %v2252
        %v2256 = vshrl.u32 2475754826, %v2253
        %v2257 = vor.u32 %v2255, %v2256
        %v2258 = vshll.u32 2475754826, %v2252
        %v2259 = vshrl.u32 2131351028, %v2253
        %v2260 = vor.u32 %v2258, %v2259
        %v2261 = vshll.u32 2131351028, %v2252
        %v2262 = vshrl.u32 2102212464, %v2253
        %v2263 = vor.u32 %v2261, %v2262
        %v2264 = vshll.u32 2102212464, %v2252
        %v2265 = vshrl.u32 920167782, %v2253
        %v2266 = vor.u32 %v2264, %v2265
        %v2267 = vshll.u32 920167782, %v2252
        %v2268 = vshrl.u32 1326507024, %v2253
        %v2269 = vor.u32 %v2267, %v2268
        %vm2270 = vcmp.lt.s32.totalorder %v2251, 1
        %vm2271 = vcmp.lt.s32.totalorder %v2251, 2
        %vm2272 = vcmp.lt.s32.totalorder %v2251, 3
        %vm2273 = vcmp.lt.s32.totalorder %v2251, 4
        %v2274 = vsel %vm2270, %v2254, %v2257
        %v2275 = vsel %vm2273, %v2263, 2102212464
        %v2276 = vsel %vm2272, %v2260, %v2275
        %v2277 = vsel %vm2271, %v2274, %v2276
        %v2278 = vsel %vm2270, %v2257, %v2260
        %v2279 = vsel %vm2273, %v2266, 920167782
        %v2280 = vsel %vm2272, %v2263, %v2279
        %v2281 = vsel %vm2271, %v2278, %v2280
        %v2282 = vsel %vm2270, %v2260, %v2263
        %v2283 = vsel %vm2273, %v2269, 1326507024
        %v2284 = vsel %vm2272, %v2266, %v2283
        %v2285 = vsel %vm2271, %v2282, %v2284
        %v2286 = vshll.u32 %v2246, 8
        %v2287 = vmul.u32.u64.compose %v2286, %v2285
        %v2288 = vextract.low.u32 %v2287
        %v2289 = vextract.high.u32 %v2287
        %v2290 = vmul.u32.u64.compose %v2286, %v2281
        %v2291 = vextract.low.u32 %v2290
        %v2292 = vextract.high.u32 %v2290
        %v2293 = vmul.u32 %v2286, %v2277
        %v2294 = vadd.s32 %v2289, %v2291
        %vm2295 = vc.u32 %v2289, %v2291
        %v2296 = vadd.s32 %v2292, 1
        %v2297 = vsel %vm2295, %v2296, %v2292
        %v2298 = vadd.s32 %v2293, %v2297
        %v2299 = vadd.s32 %v2298, 536870912
        %v2300 = vshrl.u32 %v2299, 30
        %v2301 = vshll.u32 %v2300, 30
        %v2302 = vsub.s32 %v2298, %v2301
        %vm2303 = vcmp.lt.s32.totalorder %v2302, 0
        %v2304 = vsub.s32 0, %v2302
        %v2305 = vsel %vm2303, %v2304, %v2302
        %v2306 = vclz %v2305
        %v2307 = vsub.s32 %v2306, 2
        %vm2308 = vcmp.gt.s32.totalorder 0, %v2307
        %v2309 = vsel %vm2308, 0, %v2307
        %v2310 = vsub.s32 32, %v2309
        %v2311 = vshll.u32 %v2302, %v2309
        %v2312 = vshrl.u32 %v2294, %v2310
        %v2313 = vor.u32 %v2311, %v2312
        %v2314 = vsub.s32 4294967266, %v2309
        %v2315 = vadd.s32 %v2314, 127
        %v2316 = vshll.u32 %v2315, 23
        %v2317 = vor.u32 4788187, %v2316
        %v2318 = vand.u32 2147483647, %v2317
        %v2320 = vcvt.s32.f32 %v2313
        %v2321 = vmul.f32 %v2320, %v2318
        %v2322 = vxor.u32 %v2321, 2147483648
        %v2323 = vsel %vm2240, %v2322, %v2321
        %v2324 = vsub.s32 4, %v2300
        %v2325 = vsel %vm2240, %v2324, %v2300
        %v2326 = vsel %vm2239, %v261, %v2323
        %v2327 = vsel %vm2239, 0, %v2325
        %v2328 = vcosq.f32.pop %v2326
        %v2329 = vsinq.f32.pop %v2326
        %vm2330 = vweird.f32 %v261
        %v2331 = vand.u32 %v2327, 3
        %vm2332 = vcmp.lt.s32.totalorder %v2331, 2
        %vm2333 = vcmp.eq.s32.totalorder %v2331, 0
        %v2334 = vxor.u32 %v2329, 2147483648
        %v2335 = vsel %vm2333, %v2328, %v2334
        %vm2336 = vcmp.eq.s32.totalorder %v2331, 2
        %v2337 = vxor.u32 %v2328, 2147483648
        %v2338 = vsel %vm2336, %v2337, %v2329
        %v2339 = vsel %vm2332, %v2335, %v2338
        %v2340 = vsel %vm2330, nan, %v2339
        %v2341 = vand.u32 2147483647, %v262
        %vm2342 = vcmp.le.f32.partialorder %v2341, 0.7853982
        %vm2343 = vcmp.lt.s32.totalorder %v262, 0
        %v2344 = vand.u32 %v262, 2139095040
        %v2345 = vshrl.u32 %v2344, 23
        %v2346 = vsub.s32 %v2345, 127
        %v2347 = vand.u32 2147483647, %v262
        %v2348 = vand.u32 %v2347, 8388607
        %v2349 = vor.u32 %v2348, 8388608
        %v2350 = vsub.s32 0, %v2349
        %v2351 = vadd.s32 %v2346, 1
        %vm2352 = vcmp.gt.s32.totalorder %v2351, 0
        %v2353 = vsel %vm2352, %v2351, 0
        %v2354 = vshrl.u32 %v2353, 5
        %v2355 = vand.u32 %v2353, 31
        %v2356 = vsub.s32 32, %v2355
        %v2357 = vshrl.u32 683565275, %v2356
        %v2358 = vshll.u32 683565275, %v2355
        %v2359 = vshrl.u32 2475754826, %v2356
        %v2360 = vor.u32 %v2358, %v2359
        %v2361 = vshll.u32 2475754826, %v2355
        %v2362 = vshrl.u32 2131351028, %v2356
        %v2363 = vor.u32 %v2361, %v2362
        %v2364 = vshll.u32 2131351028, %v2355
        %v2365 = vshrl.u32 2102212464, %v2356
        %v2366 = vor.u32 %v2364, %v2365
        %v2367 = vshll.u32 2102212464, %v2355
        %v2368 = vshrl.u32 920167782, %v2356
        %v2369 = vor.u32 %v2367, %v2368
        %v2370 = vshll.u32 920167782, %v2355
        %v2371 = vshrl.u32 1326507024, %v2356
        %v2372 = vor.u32 %v2370, %v2371
        %vm2373 = vcmp.lt.s32.totalorder %v2354, 1
        %vm2374 = vcmp.lt.s32.totalorder %v2354, 2
        %vm2375 = vcmp.lt.s32.totalorder %v2354, 3
        %vm2376 = vcmp.lt.s32.totalorder %v2354, 4
        %v2377 = vsel %vm2373, %v2357, %v2360
        %v2378 = vsel %vm2376, %v2366, 2102212464
        %v2379 = vsel %vm2375, %v2363, %v2378
        %v2380 = vsel %vm2374, %v2377, %v2379
        %v2381 = vsel %vm2373, %v2360, %v2363
        %v2382 = vsel %vm2376, %v2369, 920167782
        %v2383 = vsel %vm2375, %v2366, %v2382
        %v2384 = vsel %vm2374, %v2381, %v2383
        %v2385 = vsel %vm2373, %v2363, %v2366
        %v2386 = vsel %vm2376, %v2372, 1326507024
        %v2387 = vsel %vm2375, %v2369, %v2386
        %v2388 = vsel %vm2374, %v2385, %v2387
        %v2389 = vshll.u32 %v2349, 8
        %v2390 = vmul.u32.u64.compose %v2389, %v2388
        %v2391 = vextract.low.u32 %v2390
        %v2392 = vextract.high.u32 %v2390
        %v2393 = vmul.u32.u64.compose %v2389, %v2384
        %v2394 = vextract.low.u32 %v2393
        %v2395 = vextract.high.u32 %v2393
        %v2396 = vmul.u32 %v2389, %v2380
        %v2397 = vadd.s32 %v2392, %v2394
        %vm2398 = vc.u32 %v2392, %v2394
        %v2399 = vadd.s32 %v2395, 1
        %v2400 = vsel %vm2398, %v2399, %v2395
        %v2401 = vadd.s32 %v2396, %v2400
        %v2402 = vadd.s32 %v2401, 536870912
        %v2403 = vshrl.u32 %v2402, 30
        %v2404 = vshll.u32 %v2403, 30
        %v2405 = vsub.s32 %v2401, %v2404
        %vm2406 = vcmp.lt.s32.totalorder %v2405, 0
        %v2407 = vsub.s32 0, %v2405
        %v2408 = vsel %vm2406, %v2407, %v2405
        %v2409 = vclz %v2408
        %v2410 = vsub.s32 %v2409, 2
        %vm2411 = vcmp.gt.s32.totalorder 0, %v2410
        %v2412 = vsel %vm2411, 0, %v2410
        %v2413 = vsub.s32 32, %v2412
        %v2414 = vshll.u32 %v2405, %v2412
        %v2415 = vshrl.u32 %v2397, %v2413
        %v2416 = vor.u32 %v2414, %v2415
        %v2417 = vsub.s32 4294967266, %v2412
        %v2418 = vadd.s32 %v2417, 127
        %v2419 = vshll.u32 %v2418, 23
        %v2420 = vor.u32 4788187, %v2419
        %v2421 = vand.u32 2147483647, %v2420
        %v2423 = vcvt.s32.f32 %v2416
        %v2424 = vmul.f32 %v2423, %v2421
        %v2425 = vxor.u32 %v2424, 2147483648
        %v2426 = vsel %vm2343, %v2425, %v2424
        %v2427 = vsub.s32 4, %v2403
        %v2428 = vsel %vm2343, %v2427, %v2403
        %v2429 = vsel %vm2342, %v262, %v2426
        %v2430 = vsel %vm2342, 0, %v2428
        %v2431 = vcosq.f32.pop %v2429
        %v2432 = vsinq.f32.pop %v2429
        %vm2433 = vweird.f32 %v262
        %v2434 = vand.u32 %v2430, 3
        %vm2435 = vcmp.lt.s32.totalorder %v2434, 2
        %vm2436 = vcmp.eq.s32.totalorder %v2434, 0
        %v2437 = vxor.u32 %v2432, 2147483648
        %v2438 = vsel %vm2436, %v2431, %v2437
        %vm2439 = vcmp.eq.s32.totalorder %v2434, 2
        %v2440 = vxor.u32 %v2431, 2147483648
        %v2441 = vsel %vm2439, %v2440, %v2432
        %v2442 = vsel %vm2435, %v2438, %v2441
        %v2443 = vsel %vm2433, nan, %v2442
        %v2444 = vand.u32 2147483647, %v263
        %vm2445 = vcmp.le.f32.partialorder %v2444, 0.7853982
        %vm2446 = vcmp.lt.s32.totalorder %v263, 0
        %v2447 = vand.u32 %v263, 2139095040
        %v2448 = vshrl.u32 %v2447, 23
        %v2449 = vsub.s32 %v2448, 127
        %v2450 = vand.u32 2147483647, %v263
        %v2451 = vand.u32 %v2450, 8388607
        %v2452 = vor.u32 %v2451, 8388608
        %v2453 = vsub.s32 0, %v2452
        %v2454 = vadd.s32 %v2449, 1
        %vm2455 = vcmp.gt.s32.totalorder %v2454, 0
        %v2456 = vsel %vm2455, %v2454, 0
        %v2457 = vshrl.u32 %v2456, 5
        %v2458 = vand.u32 %v2456, 31
        %v2459 = vsub.s32 32, %v2458
        %v2460 = vshrl.u32 683565275, %v2459
        %v2461 = vshll.u32 683565275, %v2458
        %v2462 = vshrl.u32 2475754826, %v2459
        %v2463 = vor.u32 %v2461, %v2462
        %v2464 = vshll.u32 2475754826, %v2458
        %v2465 = vshrl.u32 2131351028, %v2459
        %v2466 = vor.u32 %v2464, %v2465
        %v2467 = vshll.u32 2131351028, %v2458
        %v2468 = vshrl.u32 2102212464, %v2459
        %v2469 = vor.u32 %v2467, %v2468
        %v2470 = vshll.u32 2102212464, %v2458
        %v2471 = vshrl.u32 920167782, %v2459
        %v2472 = vor.u32 %v2470, %v2471
        %v2473 = vshll.u32 920167782, %v2458
        %v2474 = vshrl.u32 1326507024, %v2459
        %v2475 = vor.u32 %v2473, %v2474
        %vm2476 = vcmp.lt.s32.totalorder %v2457, 1
        %vm2477 = vcmp.lt.s32.totalorder %v2457, 2
        %vm2478 = vcmp.lt.s32.totalorder %v2457, 3
        %vm2479 = vcmp.lt.s32.totalorder %v2457, 4
        %v2480 = vsel %vm2476, %v2460, %v2463
        %v2481 = vsel %vm2479, %v2469, 2102212464
        %v2482 = vsel %vm2478, %v2466, %v2481
        %v2483 = vsel %vm2477, %v2480, %v2482
        %v2484 = vsel %vm2476, %v2463, %v2466
        %v2485 = vsel %vm2479, %v2472, 920167782
        %v2486 = vsel %vm2478, %v2469, %v2485
        %v2487 = vsel %vm2477, %v2484, %v2486
        %v2488 = vsel %vm2476, %v2466, %v2469
        %v2489 = vsel %vm2479, %v2475, 1326507024
        %v2490 = vsel %vm2478, %v2472, %v2489
        %v2491 = vsel %vm2477, %v2488, %v2490
        %v2492 = vshll.u32 %v2452, 8
        %v2493 = vmul.u32.u64.compose %v2492, %v2491
        %v2494 = vextract.low.u32 %v2493
        %v2495 = vextract.high.u32 %v2493
        %v2496 = vmul.u32.u64.compose %v2492, %v2487
        %v2497 = vextract.low.u32 %v2496
        %v2498 = vextract.high.u32 %v2496
        %v2499 = vmul.u32 %v2492, %v2483
        %v2500 = vadd.s32 %v2495, %v2497
        %vm2501 = vc.u32 %v2495, %v2497
        %v2502 = vadd.s32 %v2498, 1
        %v2503 = vsel %vm2501, %v2502, %v2498
        %v2504 = vadd.s32 %v2499, %v2503
        %v2505 = vadd.s32 %v2504, 536870912
        %v2506 = vshrl.u32 %v2505, 30
        %v2507 = vshll.u32 %v2506, 30
        %v2508 = vsub.s32 %v2504, %v2507
        %vm2509 = vcmp.lt.s32.totalorder %v2508, 0
        %v2510 = vsub.s32 0, %v2508
        %v2511 = vsel %vm2509, %v2510, %v2508
        %v2512 = vclz %v2511
        %v2513 = vsub.s32 %v2512, 2
        %vm2514 = vcmp.gt.s32.totalorder 0, %v2513
        %v2515 = vsel %vm2514, 0, %v2513
        %v2516 = vsub.s32 32, %v2515
        %v2517 = vshll.u32 %v2508, %v2515
        %v2518 = vshrl.u32 %v2500, %v2516
        %v2519 = vor.u32 %v2517, %v2518
        %v2520 = vsub.s32 4294967266, %v2515
        %v2521 = vadd.s32 %v2520, 127
        %v2522 = vshll.u32 %v2521, 23
        %v2523 = vor.u32 4788187, %v2522
        %v2524 = vand.u32 2147483647, %v2523
        %v2526 = vcvt.s32.f32 %v2519
        %v2527 = vmul.f32 %v2526, %v2524
        %v2528 = vxor.u32 %v2527, 2147483648
        %v2529 = vsel %vm2446, %v2528, %v2527
        %v2530 = vsub.s32 4, %v2506
        %v2531 = vsel %vm2446, %v2530, %v2506
        %v2532 = vsel %vm2445, %v263, %v2529
        %v2533 = vsel %vm2445, 0, %v2531
        %v2534 = vcosq.f32.pop %v2532
        %v2535 = vsinq.f32.pop %v2532
        %vm2536 = vweird.f32 %v263
        %v2537 = vand.u32 %v2533, 3
        %vm2538 = vcmp.lt.s32.totalorder %v2537, 2
        %vm2539 = vcmp.eq.s32.totalorder %v2537, 0
        %v2540 = vxor.u32 %v2535, 2147483648
        %v2541 = vsel %vm2539, %v2534, %v2540
        %vm2542 = vcmp.eq.s32.totalorder %v2537, 2
        %v2543 = vxor.u32 %v2534, 2147483648
        %v2544 = vsel %vm2542, %v2543, %v2535
        %v2545 = vsel %vm2538, %v2541, %v2544
        %v2546 = vsel %vm2536, nan, %v2545
        %v2547 = vand.u32 2147483647, %v264
        %vm2548 = vcmp.le.f32.partialorder %v2547, 0.7853982
        %vm2549 = vcmp.lt.s32.totalorder %v264, 0
        %v2550 = vand.u32 %v264, 2139095040
        %v2551 = vshrl.u32 %v2550, 23
        %v2552 = vsub.s32 %v2551, 127
        %v2553 = vand.u32 2147483647, %v264
        %v2554 = vand.u32 %v2553, 8388607
        %v2555 = vor.u32 %v2554, 8388608
        %v2556 = vsub.s32 0, %v2555
        %v2557 = vadd.s32 %v2552, 1
        %vm2558 = vcmp.gt.s32.totalorder %v2557, 0
        %v2559 = vsel %vm2558, %v2557, 0
        %v2560 = vshrl.u32 %v2559, 5
        %v2561 = vand.u32 %v2559, 31
        %v2562 = vsub.s32 32, %v2561
        %v2563 = vshrl.u32 683565275, %v2562
        %v2564 = vshll.u32 683565275, %v2561
        %v2565 = vshrl.u32 2475754826, %v2562
        %v2566 = vor.u32 %v2564, %v2565
        %v2567 = vshll.u32 2475754826, %v2561
        %v2568 = vshrl.u32 2131351028, %v2562
        %v2569 = vor.u32 %v2567, %v2568
        %v2570 = vshll.u32 2131351028, %v2561
        %v2571 = vshrl.u32 2102212464, %v2562
        %v2572 = vor.u32 %v2570, %v2571
        %v2573 = vshll.u32 2102212464, %v2561
        %v2574 = vshrl.u32 920167782, %v2562
        %v2575 = vor.u32 %v2573, %v2574
        %v2576 = vshll.u32 920167782, %v2561
        %v2577 = vshrl.u32 1326507024, %v2562
        %v2578 = vor.u32 %v2576, %v2577
        %vm2579 = vcmp.lt.s32.totalorder %v2560, 1
        %vm2580 = vcmp.lt.s32.totalorder %v2560, 2
        %vm2581 = vcmp.lt.s32.totalorder %v2560, 3
        %vm2582 = vcmp.lt.s32.totalorder %v2560, 4
        %v2583 = vsel %vm2579, %v2563, %v2566
        %v2584 = vsel %vm2582, %v2572, 2102212464
        %v2585 = vsel %vm2581, %v2569, %v2584
        %v2586 = vsel %vm2580, %v2583, %v2585
        %v2587 = vsel %vm2579, %v2566, %v2569
        %v2588 = vsel %vm2582, %v2575, 920167782
        %v2589 = vsel %vm2581, %v2572, %v2588
        %v2590 = vsel %vm2580, %v2587, %v2589
        %v2591 = vsel %vm2579, %v2569, %v2572
        %v2592 = vsel %vm2582, %v2578, 1326507024
        %v2593 = vsel %vm2581, %v2575, %v2592
        %v2594 = vsel %vm2580, %v2591, %v2593
        %v2595 = vshll.u32 %v2555, 8
        %v2596 = vmul.u32.u64.compose %v2595, %v2594
        %v2597 = vextract.low.u32 %v2596
        %v2598 = vextract.high.u32 %v2596
        %v2599 = vmul.u32.u64.compose %v2595, %v2590
        %v2600 = vextract.low.u32 %v2599
        %v2601 = vextract.high.u32 %v2599
        %v2602 = vmul.u32 %v2595, %v2586
        %v2603 = vadd.s32 %v2598, %v2600
        %vm2604 = vc.u32 %v2598, %v2600
        %v2605 = vadd.s32 %v2601, 1
        %v2606 = vsel %vm2604, %v2605, %v2601
        %v2607 = vadd.s32 %v2602, %v2606
        %v2608 = vadd.s32 %v2607, 536870912
        %v2609 = vshrl.u32 %v2608, 30
        %v2610 = vshll.u32 %v2609, 30
        %v2611 = vsub.s32 %v2607, %v2610
        %vm2612 = vcmp.lt.s32.totalorder %v2611, 0
        %v2613 = vsub.s32 0, %v2611
        %v2614 = vsel %vm2612, %v2613, %v2611
        %v2615 = vclz %v2614
        %v2616 = vsub.s32 %v2615, 2
        %vm2617 = vcmp.gt.s32.totalorder 0, %v2616
        %v2618 = vsel %vm2617, 0, %v2616
        %v2619 = vsub.s32 32, %v2618
        %v2620 = vshll.u32 %v2611, %v2618
        %v2621 = vshrl.u32 %v2603, %v2619
        %v2622 = vor.u32 %v2620, %v2621
        %v2623 = vsub.s32 4294967266, %v2618
        %v2624 = vadd.s32 %v2623, 127
        %v2625 = vshll.u32 %v2624, 23
        %v2626 = vor.u32 4788187, %v2625
        %v2627 = vand.u32 2147483647, %v2626
        %v2629 = vcvt.s32.f32 %v2622
        %v2630 = vmul.f32 %v2629, %v2627
        %v2631 = vxor.u32 %v2630, 2147483648
        %v2632 = vsel %vm2549, %v2631, %v2630
        %v2633 = vsub.s32 4, %v2609
        %v2634 = vsel %vm2549, %v2633, %v2609
        %v2635 = vsel %vm2548, %v264, %v2632
        %v2636 = vsel %vm2548, 0, %v2634
        %v2637 = vcosq.f32.pop %v2635
        %v2638 = vsinq.f32.pop %v2635
        %vm2639 = vweird.f32 %v264
        %v2640 = vand.u32 %v2636, 3
        %vm2641 = vcmp.lt.s32.totalorder %v2640, 2
        %vm2642 = vcmp.eq.s32.totalorder %v2640, 0
        %v2643 = vxor.u32 %v2638, 2147483648
        %v2644 = vsel %vm2642, %v2637, %v2643
        %vm2645 = vcmp.eq.s32.totalorder %v2640, 2
        %v2646 = vxor.u32 %v2637, 2147483648
        %v2647 = vsel %vm2645, %v2646, %v2638
        %v2648 = vsel %vm2641, %v2644, %v2647
        %v2649 = vsel %vm2639, nan, %v2648
        %v2650 = vand.u32 2147483647, %v265
        %vm2651 = vcmp.le.f32.partialorder %v2650, 0.7853982
        %vm2652 = vcmp.lt.s32.totalorder %v265, 0
        %v2653 = vand.u32 %v265, 2139095040
        %v2654 = vshrl.u32 %v2653, 23
        %v2655 = vsub.s32 %v2654, 127
        %v2656 = vand.u32 2147483647, %v265
        %v2657 = vand.u32 %v2656, 8388607
        %v2658 = vor.u32 %v2657, 8388608
        %v2659 = vsub.s32 0, %v2658
        %v2660 = vadd.s32 %v2655, 1
        %vm2661 = vcmp.gt.s32.totalorder %v2660, 0
        %v2662 = vsel %vm2661, %v2660, 0
        %v2663 = vshrl.u32 %v2662, 5
        %v2664 = vand.u32 %v2662, 31
        %v2665 = vsub.s32 32, %v2664
        %v2666 = vshrl.u32 683565275, %v2665
        %v2667 = vshll.u32 683565275, %v2664
        %v2668 = vshrl.u32 2475754826, %v2665
        %v2669 = vor.u32 %v2667, %v2668
        %v2670 = vshll.u32 2475754826, %v2664
        %v2671 = vshrl.u32 2131351028, %v2665
        %v2672 = vor.u32 %v2670, %v2671
        %v2673 = vshll.u32 2131351028, %v2664
        %v2674 = vshrl.u32 2102212464, %v2665
        %v2675 = vor.u32 %v2673, %v2674
        %v2676 = vshll.u32 2102212464, %v2664
        %v2677 = vshrl.u32 920167782, %v2665
        %v2678 = vor.u32 %v2676, %v2677
        %v2679 = vshll.u32 920167782, %v2664
        %v2680 = vshrl.u32 1326507024, %v2665
        %v2681 = vor.u32 %v2679, %v2680
        %vm2682 = vcmp.lt.s32.totalorder %v2663, 1
        %vm2683 = vcmp.lt.s32.totalorder %v2663, 2
        %vm2684 = vcmp.lt.s32.totalorder %v2663, 3
        %vm2685 = vcmp.lt.s32.totalorder %v2663, 4
        %v2686 = vsel %vm2682, %v2666, %v2669
        %v2687 = vsel %vm2685, %v2675, 2102212464
        %v2688 = vsel %vm2684, %v2672, %v2687
        %v2689 = vsel %vm2683, %v2686, %v2688
        %v2690 = vsel %vm2682, %v2669, %v2672
        %v2691 = vsel %vm2685, %v2678, 920167782
        %v2692 = vsel %vm2684, %v2675, %v2691
        %v2693 = vsel %vm2683, %v2690, %v2692
        %v2694 = vsel %vm2682, %v2672, %v2675
        %v2695 = vsel %vm2685, %v2681, 1326507024
        %v2696 = vsel %vm2684, %v2678, %v2695
        %v2697 = vsel %vm2683, %v2694, %v2696
        %v2698 = vshll.u32 %v2658, 8
        %v2699 = vmul.u32.u64.compose %v2698, %v2697
        %v2700 = vextract.low.u32 %v2699
        %v2701 = vextract.high.u32 %v2699
        %v2702 = vmul.u32.u64.compose %v2698, %v2693
        %v2703 = vextract.low.u32 %v2702
        %v2704 = vextract.high.u32 %v2702
        %v2705 = vmul.u32 %v2698, %v2689
        %v2706 = vadd.s32 %v2701, %v2703
        %vm2707 = vc.u32 %v2701, %v2703
        %v2708 = vadd.s32 %v2704, 1
        %v2709 = vsel %vm2707, %v2708, %v2704
        %v2710 = vadd.s32 %v2705, %v2709
        %v2711 = vadd.s32 %v2710, 536870912
        %v2712 = vshrl.u32 %v2711, 30
        %v2713 = vshll.u32 %v2712, 30
        %v2714 = vsub.s32 %v2710, %v2713
        %vm2715 = vcmp.lt.s32.totalorder %v2714, 0
        %v2716 = vsub.s32 0, %v2714
        %v2717 = vsel %vm2715, %v2716, %v2714
        %v2718 = vclz %v2717
        %v2719 = vsub.s32 %v2718, 2
        %vm2720 = vcmp.gt.s32.totalorder 0, %v2719
        %v2721 = vsel %vm2720, 0, %v2719
        %v2722 = vsub.s32 32, %v2721
        %v2723 = vshll.u32 %v2714, %v2721
        %v2724 = vshrl.u32 %v2706, %v2722
        %v2725 = vor.u32 %v2723, %v2724
        %v2726 = vsub.s32 4294967266, %v2721
        %v2727 = vadd.s32 %v2726, 127
        %v2728 = vshll.u32 %v2727, 23
        %v2729 = vor.u32 4788187, %v2728
        %v2730 = vand.u32 2147483647, %v2729
        %v2732 = vcvt.s32.f32 %v2725
        %v2733 = vmul.f32 %v2732, %v2730
        %v2734 = vxor.u32 %v2733, 2147483648
        %v2735 = vsel %vm2652, %v2734, %v2733
        %v2736 = vsub.s32 4, %v2712
        %v2737 = vsel %vm2652, %v2736, %v2712
        %v2738 = vsel %vm2651, %v265, %v2735
        %v2739 = vsel %vm2651, 0, %v2737
        %v2740 = vcosq.f32.pop %v2738
        %v2741 = vsinq.f32.pop %v2738
        %vm2742 = vweird.f32 %v265
        %v2743 = vand.u32 %v2739, 3
        %vm2744 = vcmp.lt.s32.totalorder %v2743, 2
        %vm2745 = vcmp.eq.s32.totalorder %v2743, 0
        %v2746 = vxor.u32 %v2741, 2147483648
        %v2747 = vsel %vm2745, %v2740, %v2746
        %vm2748 = vcmp.eq.s32.totalorder %v2743, 2
        %v2749 = vxor.u32 %v2740, 2147483648
        %v2750 = vsel %vm2748, %v2749, %v2741
        %v2751 = vsel %vm2744, %v2747, %v2750
        %v2752 = vsel %vm2742, nan, %v2751
        %v2753 = vand.u32 2147483647, %v266
        %vm2754 = vcmp.le.f32.partialorder %v2753, 0.7853982
        %vm2755 = vcmp.lt.s32.totalorder %v266, 0
        %v2756 = vand.u32 %v266, 2139095040
        %v2757 = vshrl.u32 %v2756, 23
        %v2758 = vsub.s32 %v2757, 127
        %v2759 = vand.u32 2147483647, %v266
        %v2760 = vand.u32 %v2759, 8388607
        %v2761 = vor.u32 %v2760, 8388608
        %v2762 = vsub.s32 0, %v2761
        %v2763 = vadd.s32 %v2758, 1
        %vm2764 = vcmp.gt.s32.totalorder %v2763, 0
        %v2765 = vsel %vm2764, %v2763, 0
        %v2766 = vshrl.u32 %v2765, 5
        %v2767 = vand.u32 %v2765, 31
        %v2768 = vsub.s32 32, %v2767
        %v2769 = vshrl.u32 683565275, %v2768
        %v2770 = vshll.u32 683565275, %v2767
        %v2771 = vshrl.u32 2475754826, %v2768
        %v2772 = vor.u32 %v2770, %v2771
        %v2773 = vshll.u32 2475754826, %v2767
        %v2774 = vshrl.u32 2131351028, %v2768
        %v2775 = vor.u32 %v2773, %v2774
        %v2776 = vshll.u32 2131351028, %v2767
        %v2777 = vshrl.u32 2102212464, %v2768
        %v2778 = vor.u32 %v2776, %v2777
        %v2779 = vshll.u32 2102212464, %v2767
        %v2780 = vshrl.u32 920167782, %v2768
        %v2781 = vor.u32 %v2779, %v2780
        %v2782 = vshll.u32 920167782, %v2767
        %v2783 = vshrl.u32 1326507024, %v2768
        %v2784 = vor.u32 %v2782, %v2783
        %vm2785 = vcmp.lt.s32.totalorder %v2766, 1
        %vm2786 = vcmp.lt.s32.totalorder %v2766, 2
        %vm2787 = vcmp.lt.s32.totalorder %v2766, 3
        %vm2788 = vcmp.lt.s32.totalorder %v2766, 4
        %v2789 = vsel %vm2785, %v2769, %v2772
        %v2790 = vsel %vm2788, %v2778, 2102212464
        %v2791 = vsel %vm2787, %v2775, %v2790
        %v2792 = vsel %vm2786, %v2789, %v2791
        %v2793 = vsel %vm2785, %v2772, %v2775
        %v2794 = vsel %vm2788, %v2781, 920167782
        %v2795 = vsel %vm2787, %v2778, %v2794
        %v2796 = vsel %vm2786, %v2793, %v2795
        %v2797 = vsel %vm2785, %v2775, %v2778
        %v2798 = vsel %vm2788, %v2784, 1326507024
        %v2799 = vsel %vm2787, %v2781, %v2798
        %v2800 = vsel %vm2786, %v2797, %v2799
        %v2801 = vshll.u32 %v2761, 8
        %v2802 = vmul.u32.u64.compose %v2801, %v2800
        %v2803 = vextract.low.u32 %v2802
        %v2804 = vextract.high.u32 %v2802
        %v2805 = vmul.u32.u64.compose %v2801, %v2796
        %v2806 = vextract.low.u32 %v2805
        %v2807 = vextract.high.u32 %v2805
        %v2808 = vmul.u32 %v2801, %v2792
        %v2809 = vadd.s32 %v2804, %v2806
        %vm2810 = vc.u32 %v2804, %v2806
        %v2811 = vadd.s32 %v2807, 1
        %v2812 = vsel %vm2810, %v2811, %v2807
        %v2813 = vadd.s32 %v2808, %v2812
        %v2814 = vadd.s32 %v2813, 536870912
        %v2815 = vshrl.u32 %v2814, 30
        %v2816 = vshll.u32 %v2815, 30
        %v2817 = vsub.s32 %v2813, %v2816
        %vm2818 = vcmp.lt.s32.totalorder %v2817, 0
        %v2819 = vsub.s32 0, %v2817
        %v2820 = vsel %vm2818, %v2819, %v2817
        %v2821 = vclz %v2820
        %v2822 = vsub.s32 %v2821, 2
        %vm2823 = vcmp.gt.s32.totalorder 0, %v2822
        %v2824 = vsel %vm2823, 0, %v2822
        %v2825 = vsub.s32 32, %v2824
        %v2826 = vshll.u32 %v2817, %v2824
        %v2827 = vshrl.u32 %v2809, %v2825
        %v2828 = vor.u32 %v2826, %v2827
        %v2829 = vsub.s32 4294967266, %v2824
        %v2830 = vadd.s32 %v2829, 127
        %v2831 = vshll.u32 %v2830, 23
        %v2832 = vor.u32 4788187, %v2831
        %v2833 = vand.u32 2147483647, %v2832
        %v2835 = vcvt.s32.f32 %v2828
        %v2836 = vmul.f32 %v2835, %v2833
        %v2837 = vxor.u32 %v2836, 2147483648
        %v2838 = vsel %vm2755, %v2837, %v2836
        %v2839 = vsub.s32 4, %v2815
        %v2840 = vsel %vm2755, %v2839, %v2815
        %v2841 = vsel %vm2754, %v266, %v2838
        %v2842 = vsel %vm2754, 0, %v2840
        %v2843 = vcosq.f32.pop %v2841
        %v2844 = vsinq.f32.pop %v2841
        %vm2845 = vweird.f32 %v266
        %v2846 = vand.u32 %v2842, 3
        %vm2847 = vcmp.lt.s32.totalorder %v2846, 2
        %vm2848 = vcmp.eq.s32.totalorder %v2846, 0
        %v2849 = vxor.u32 %v2844, 2147483648
        %v2850 = vsel %vm2848, %v2843, %v2849
        %vm2851 = vcmp.eq.s32.totalorder %v2846, 2
        %v2852 = vxor.u32 %v2843, 2147483648
        %v2853 = vsel %vm2851, %v2852, %v2844
        %v2854 = vsel %vm2847, %v2850, %v2853
        %v2855 = vsel %vm2845, nan, %v2854
        %v2856 = vand.u32 2147483647, %v267
        %vm2857 = vcmp.le.f32.partialorder %v2856, 0.7853982
        %vm2858 = vcmp.lt.s32.totalorder %v267, 0
        %v2859 = vand.u32 %v267, 2139095040
        %v2860 = vshrl.u32 %v2859, 23
        %v2861 = vsub.s32 %v2860, 127
        %v2862 = vand.u32 2147483647, %v267
        %v2863 = vand.u32 %v2862, 8388607
        %v2864 = vor.u32 %v2863, 8388608
        %v2865 = vsub.s32 0, %v2864
        %v2866 = vadd.s32 %v2861, 1
        %vm2867 = vcmp.gt.s32.totalorder %v2866, 0
        %v2868 = vsel %vm2867, %v2866, 0
        %v2869 = vshrl.u32 %v2868, 5
        %v2870 = vand.u32 %v2868, 31
        %v2871 = vsub.s32 32, %v2870
        %v2872 = vshrl.u32 683565275, %v2871
        %v2873 = vshll.u32 683565275, %v2870
        %v2874 = vshrl.u32 2475754826, %v2871
        %v2875 = vor.u32 %v2873, %v2874
        %v2876 = vshll.u32 2475754826, %v2870
        %v2877 = vshrl.u32 2131351028, %v2871
        %v2878 = vor.u32 %v2876, %v2877
        %v2879 = vshll.u32 2131351028, %v2870
        %v2880 = vshrl.u32 2102212464, %v2871
        %v2881 = vor.u32 %v2879, %v2880
        %v2882 = vshll.u32 2102212464, %v2870
        %v2883 = vshrl.u32 920167782, %v2871
        %v2884 = vor.u32 %v2882, %v2883
        %v2885 = vshll.u32 920167782, %v2870
        %v2886 = vshrl.u32 1326507024, %v2871
        %v2887 = vor.u32 %v2885, %v2886
        %vm2888 = vcmp.lt.s32.totalorder %v2869, 1
        %vm2889 = vcmp.lt.s32.totalorder %v2869, 2
        %vm2890 = vcmp.lt.s32.totalorder %v2869, 3
        %vm2891 = vcmp.lt.s32.totalorder %v2869, 4
        %v2892 = vsel %vm2888, %v2872, %v2875
        %v2893 = vsel %vm2891, %v2881, 2102212464
        %v2894 = vsel %vm2890, %v2878, %v2893
        %v2895 = vsel %vm2889, %v2892, %v2894
        %v2896 = vsel %vm2888, %v2875, %v2878
        %v2897 = vsel %vm2891, %v2884, 920167782
        %v2898 = vsel %vm2890, %v2881, %v2897
        %v2899 = vsel %vm2889, %v2896, %v2898
        %v2900 = vsel %vm2888, %v2878, %v2881
        %v2901 = vsel %vm2891, %v2887, 1326507024
        %v2902 = vsel %vm2890, %v2884, %v2901
        %v2903 = vsel %vm2889, %v2900, %v2902
        %v2904 = vshll.u32 %v2864, 8
        %v2905 = vmul.u32.u64.compose %v2904, %v2903
        %v2906 = vextract.low.u32 %v2905
        %v2907 = vextract.high.u32 %v2905
        %v2908 = vmul.u32.u64.compose %v2904, %v2899
        %v2909 = vextract.low.u32 %v2908
        %v2910 = vextract.high.u32 %v2908
        %v2911 = vmul.u32 %v2904, %v2895
        %v2912 = vadd.s32 %v2907, %v2909
        %vm2913 = vc.u32 %v2907, %v2909
        %v2914 = vadd.s32 %v2910, 1
        %v2915 = vsel %vm2913, %v2914, %v2910
        %v2916 = vadd.s32 %v2911, %v2915
        %v2917 = vadd.s32 %v2916, 536870912
        %v2918 = vshrl.u32 %v2917, 30
        %v2919 = vshll.u32 %v2918, 30
        %v2920 = vsub.s32 %v2916, %v2919
        %vm2921 = vcmp.lt.s32.totalorder %v2920, 0
        %v2922 = vsub.s32 0, %v2920
        %v2923 = vsel %vm2921, %v2922, %v2920
        %v2924 = vclz %v2923
        %v2925 = vsub.s32 %v2924, 2
        %vm2926 = vcmp.gt.s32.totalorder 0, %v2925
        %v2927 = vsel %vm2926, 0, %v2925
        %v2928 = vsub.s32 32, %v2927
        %v2929 = vshll.u32 %v2920, %v2927
        %v2930 = vshrl.u32 %v2912, %v2928
        %v2931 = vor.u32 %v2929, %v2930
        %v2932 = vsub.s32 4294967266, %v2927
        %v2933 = vadd.s32 %v2932, 127
        %v2934 = vshll.u32 %v2933, 23
        %v2935 = vor.u32 4788187, %v2934
        %v2936 = vand.u32 2147483647, %v2935
        %v2938 = vcvt.s32.f32 %v2931
        %v2939 = vmul.f32 %v2938, %v2936
        %v2940 = vxor.u32 %v2939, 2147483648
        %v2941 = vsel %vm2858, %v2940, %v2939
        %v2942 = vsub.s32 4, %v2918
        %v2943 = vsel %vm2858, %v2942, %v2918
        %v2944 = vsel %vm2857, %v267, %v2941
        %v2945 = vsel %vm2857, 0, %v2943
        %v2946 = vcosq.f32.pop %v2944
        %v2947 = vsinq.f32.pop %v2944
        %vm2948 = vweird.f32 %v267
        %v2949 = vand.u32 %v2945, 3
        %vm2950 = vcmp.lt.s32.totalorder %v2949, 2
        %vm2951 = vcmp.eq.s32.totalorder %v2949, 0
        %v2952 = vxor.u32 %v2947, 2147483648
        %v2953 = vsel %vm2951, %v2946, %v2952
        %vm2954 = vcmp.eq.s32.totalorder %v2949, 2
        %v2955 = vxor.u32 %v2946, 2147483648
        %v2956 = vsel %vm2954, %v2955, %v2947
        %v2957 = vsel %vm2950, %v2953, %v2956
        %v2958 = vsel %vm2948, nan, %v2957
        %2959 = vst [vmem:[%s149] sm:$0xff] %v371
        %2960 = vst [vmem:[%s149 + $0x8] sm:$0xff] %v1722
        %2961 = vst [vmem:[%s149 + $0x10] sm:$0xff] %v475
        %2962 = vst [vmem:[%s149 + $0x18] sm:$0xff] %v1825
        %2963 = vst [vmem:[%s149 + $0x20] sm:$0xff] %v579
        %2964 = vst [vmem:[%s149 + $0x28] sm:$0xff] %v1928
        %2965 = vst [vmem:[%s149 + $0x30] sm:$0xff] %v683
        %2966 = vst [vmem:[%s149 + $0x38] sm:$0xff] %v2031
        %2967 = vst [vmem:[%s149 + $0x40] sm:$0xff] %v787
        %2968 = vst [vmem:[%s149 + $0x48] sm:$0xff] %v2134
        %2969 = vst [vmem:[%s149 + $0x50] sm:$0xff] %v891
        %2970 = vst [vmem:[%s149 + $0x58] sm:$0xff] %v2237
        %2971 = vst [vmem:[%s149 + $0x60] sm:$0xff] %v995
        %2972 = vst [vmem:[%s149 + $0x68] sm:$0xff] %v2340
        %2973 = vst [vmem:[%s149 + $0x70] sm:$0xff] %v1099
        %2974 = vst [vmem:[%s149 + $0x78] sm:$0xff] %v2443
        %2975 = vst [vmem:[%s149 + $0x80] sm:$0xff] %v1203
        %2976 = vst [vmem:[%s149 + $0x88] sm:$0xff] %v2546
        %2977 = vst [vmem:[%s149 + $0x90] sm:$0xff] %v1307
        %2978 = vst [vmem:[%s149 + $0x98] sm:$0xff] %v2649
        %2979 = vst [vmem:[%s149 + $0xa0] sm:$0xff] %v1411
        %2980 = vst [vmem:[%s149 + $0xa8] sm:$0xff] %v2752
        %2981 = vst [vmem:[%s149 + $0xb0] sm:$0xff] %v1515
        %2982 = vst [vmem:[%s149 + $0xb8] sm:$0xff] %v2855
        %2983 = vst [vmem:[%s149 + $0xc0] sm:$0xff] %v1619
        %2984 = vst [vmem:[%s149 + $0xc8] sm:$0xff] %v2958
        %s2985 = sand.u32 %s71, 1
        %s2986 = scalar_lea.sflag [#allocation3], %s2985
        %s2987 = sand.u32 %s71, 1
        %s2988 = smul.addr %s2987, 208
        %s2989 = scalar_lea.vmem [#allocation2], %s2988
        // Predicated region
        $region29: #{tpu_custom_call.1} parent=27 // pred_check
          %p2990 = pneg %p81
        $region30: #{tpu_custom_call.1} parent=27 // pred_check_branch
          %2992 = sbr.rel (%p2990) target = $region32
        $region31: #{tpu_custom_call.1} parent=27 // pred_region
          %s2993 = smul.u32 13, %s16
          %s2994 = ssub.s32 25, %s2993
          %p2995 = scmp.lt.s32.totalorder %s2994, 13
          %s2996 = scalar_select %p2995, %s2994, 13
          %s2997 = smul.u32 128, %s2996
          %s2998 = smul.u32 %s2997, 2
          %s3000 = ssub.s32 3328, %s2998
          %3001 = vsyncadd %s2986, %s3000
          %p3002 = scmp.ne.s32.totalorder 0, %s2998
          %s3003 = smul.addr %s2993, 2
          %s3004 = smul.addr %s3003, 128
          %s3005 = scalar_lea.hbm %s2, %s3004
          %s3006 = smul.u32 16, %s2996
          %s3007 = sshll.u32 %s2989, 4
          %s3008 = int_to_ptr.vmem [resolvable:$true] %s3007
          %s3009 = sshll.u32 %s3006, 4
          %3013 = dma.vmem_to_hbm [thread:$0]  (%p3002), %s3008, %s3009, %s3005, %s2986, 256, 256, 16
        $region32: #{tpu_custom_call.1} parent=27 // pred_fallthru
          _
      $region28: #{tpu_custom_call.1} parent=5 // pred_fallthru
        _
      %p3014 = scmp.le.s32.totalorder 2, %s11
      // Predicated region
      $region33: #{tpu_custom_call.1} parent=5 // pred_check
        %p3015 = pneg %p3014
      $region34: #{tpu_custom_call.1} parent=5 // pred_check_branch
        %3017 = sbr.rel (%p3015) target = $region36
      $region35: #{tpu_custom_call.1} parent=5 // pred_region
        %s3018 = ssub.s32 %s11, 2
        // Predicated region
        $region37: #{tpu_custom_call.1} parent=35 // pred_check
          %p3019 = pneg %p87
        $region38: #{tpu_custom_call.1} parent=35 // pred_check_branch
          %3021 = sbr.rel (%p3019) target = $region40
        $region39: #{tpu_custom_call.1} parent=35 // pred_region
          %s3022 = sand.u32 %s72, 1
          %s3023 = scalar_lea.sflag [#allocation3], %s3022
          %s3024 = sand.u32 %s72, 1
          %s3025 = smul.addr %s3024, 208
          %s3026 = scalar_lea.vmem [#allocation2], %s3025
          %3027 = dma.done %s3023, 3328
        $region40: #{tpu_custom_call.1} parent=35 // pred_fallthru
          _
      $region36: #{tpu_custom_call.1} parent=5 // pred_fallthru
        _
    $region6: #{tpu_custom_call.1} parent=1 // loop_footer
      %s15 = sadd.s32 1, %s11
    $region7: #{tpu_custom_call.1} parent=1 // loop_footer_branch
      %10 = sbr.rel target = $region3
    $region8: #{tpu_custom_call.1} parent=1 // loop_exit
      _
    %3028 = vsyncpa [#allocation3], 1
    %s3029 = scalar_lea.sflag [#allocation3], 1
    %3030 = vsyncpa %s3029, 1

</llo_original>
